<compile_context>
chip_gen: v5e
topology: v5e:2x2
jax: 0.10.0
libtpu: 0.0.40
codegen_flags: <defaults>
</compile_context>

<pallas_src>
import jax
import jax.numpy as jnp
from jax.experimental import pallas as pl
from jax.experimental.pallas import tpu as pltpu


def _combined_kernel(x_ref, w1_ref, b1_ref, w2_ref, b2_ref, o_ref):
    # global_model: Linear + ReLU.
    # Cast the streamed x tile to the weight dtype *inside* the kernel (no
    # extra HBM pass over x); MXU accumulates in f32.
    x = x_ref[...].astype(w1_ref.dtype)
    h = jnp.dot(x, w1_ref[...], preferred_element_type=jnp.float32)
    # Bias + ReLU in f32 on the VPU (exact, and v5e has no bf16 VPU/EUP).
    h = jnp.maximum(h + b1_ref[...], 0.0)
    # local_model: Linear.  Downcast the activation to the weight dtype for the
    # MXU (bf16 fast path on v6e/v7x), accumulate in f32.
    y = jnp.dot(h.astype(w2_ref.dtype), w2_ref[...],
                preferred_element_type=jnp.float32)
    y = y + b2_ref[...]
    o_ref[...] = y.astype(o_ref.dtype)


def combined_model(x, w1, b1, w2, b2, *, tm=512, mxu_dtype=jnp.bfloat16):
    """Fused local_model(global_model(x)) as a single tiled Pallas TPU kernel.

    x : (B, D_in)   w1 : (D_in, D_h)   b1 : (1, D_h) or (D_h,)
    w2 : (D_h, D_out)  b2 : (1, D_out) or (D_out,)   ->   (B, D_out)

    Feature dims (D_in, D_h, D_out) should be multiples of 128 for lane-dense
    loads/stores (smaller D_out falls into masked partial stores -- slow but
    correct).  The batch axis needs no padding: the ragged last block is
    masked by Pallas.

    mxu_dtype: dtype fed to the MXU (weights cast once here, activations cast
    in-kernel).  Default bf16 = the fast path on every TPU generation;
    accumulation and the bias/ReLU epilogue stay f32.  Pass None for the exact
    f32 path.
    """
    B, D_in = x.shape
    if mxu_dtype is not None:
        w1 = w1.astype(mxu_dtype)
        w2 = w2.astype(mxu_dtype)
    b1 = jnp.asarray(b1, jnp.float32).reshape(1, -1)
    b2 = jnp.asarray(b2, jnp.float32).reshape(1, -1)
    D_h = w1.shape[1]
    D_out = w2.shape[1]

    # Batch tile: multiple of 8 (sublanes), capped at `tm`, clamped to the
    # batch so a small batch is a single (possibly partial) block.
    tm_eff = max(8, min(tm, ((B + 7) // 8) * 8))
    grid = (pl.cdiv(B, tm_eff),)  # ragged last block handled by Pallas masking

    isz = lambda a: jnp.dtype(a.dtype).itemsize

    def vmem_budget(n_weight_buffers):
        xbuf = 2 * tm_eff * D_in * isz(x)            # double-buffered x tiles
        obuf = 2 * tm_eff * D_out * isz(x)           # double-buffered out tiles
        wbuf = n_weight_buffers * (D_in * D_h * isz(w1) + D_h * D_out * isz(w2)
                                   + (D_h + D_out) * 4)
        hbuf = tm_eff * D_h * 4                      # f32 intermediate (staged via VMEM)
        need = xbuf + obuf + wbuf + hbuf
        # Generous headroom; clamp to what the smallest-VMEM generation (v7x,
        # 64 MiB/TC) can physically provide.
        return int(min(max(int(need * 1.5) + (2 << 20), 4 << 20), 64 << 20))

    flops = 2 * B * D_in * D_h + 2 * B * D_h * D_out
    bytes_accessed = (x.size * isz(x) + w1.size * isz(w1) + b1.size * 4
                      + w2.size * isz(w2) + b2.size * 4 + B * D_out * isz(x))
    cost = pl.CostEstimate(flops=flops, transcendentals=0,
                           bytes_accessed=bytes_accessed)

    def run(weight_pipeline_mode):
        res_kwargs = ({} if weight_pipeline_mode is None
                      else {"pipeline_mode": weight_pipeline_mode})
        n_buf = 2 if weight_pipeline_mode is None else 1
        grid_spec = pltpu.PrefetchScalarGridSpec(
            num_scalar_prefetch=0,
            grid=grid,
            in_specs=[
                # x: one batch tile per grid step (streamed / pipelined)
                pl.BlockSpec((tm_eff, D_in), lambda i: (i, 0)),
                # weights & biases: constant index_map -> resident in VMEM,
                # single-buffered when supported (DMA'd exactly once).
                pl.BlockSpec((D_in, D_h), lambda i: (0, 0), **res_kwargs),
                pl.BlockSpec((1, D_h), lambda i: (0, 0), **res_kwargs),
                pl.BlockSpec((D_h, D_out), lambda i: (0, 0), **res_kwargs),
                pl.BlockSpec((1, D_out), lambda i: (0, 0), **res_kwargs),
            ],
            out_specs=pl.BlockSpec((tm_eff, D_out), lambda i: (i, 0)),
        )
        return pl.pallas_call(
            _combined_kernel,
            out_shape=jax.ShapeDtypeStruct((B, D_out), x.dtype),
            grid_spec=grid_spec,
            compiler_params=pltpu.CompilerParams(
                # Independent batch tiles -> shard across TensorCores (v7x).
                dimension_semantics=("parallel",),
                vmem_limit_bytes=vmem_budget(n_buf)),
            cost_estimate=cost,
        )(x, w1, b1, w2, b2)

    try:
        # Preferred: single-buffered resident weights (halves weight VMEM).
        return run(pl.Buffered(1))
    except Exception:
        # Fallback for jax/Mosaic builds that reject pipeline_mode=Buffered(1):
        # identical math, default (double) buffering for the resident operands.
        return run(None)


def _reference(x, w1, b1, w2, b2):
    h = jnp.maximum(x @ w1 + b1.reshape(1, -1), 0.0)
    return h @ w2 + b2.reshape(1, -1)


if __name__ == "__main__":
    key = jax.random.PRNGKey(0)

    # Lane/sublane-friendly, small shapes.
    B, D_in, D_h, D_out = 512, 256, 256, 128

    k_x, k_w1, k_b1, k_w2, k_b2 = jax.random.split(key, 5)
    x = jax.random.normal(k_x, (B, D_in), dtype=jnp.float32)
    # Deterministic synthetic params (shapes mirror the two nn.Linear layers).
    w1 = jax.random.normal(k_w1, (D_in, D_h), dtype=jnp.float32) * 0.05
    b1 = jax.random.normal(k_b1, (1, D_h), dtype=jnp.float32) * 0.05
    w2 = jax.random.normal(k_w2, (D_h, D_out), dtype=jnp.float32) * 0.05
    b2 = jax.random.normal(k_b2, (1, D_out), dtype=jnp.float32) * 0.05

    ref = _reference(x, w1, b1, w2, b2)

    # 1) Exact f32-operand path, multi-step pipelined grid (tm=128 -> grid=(4,)).
    out = jax.block_until_ready(
        combined_model(x, w1, b1, w2, b2, tm=128, mxu_dtype=None))
    assert out.shape == (B, D_out)
    assert jnp.allclose(out, ref, atol=1e-4, rtol=1e-4)

    # 2) Default bf16-MXU fast path (f32 accumulation), single 512-row tile.
    #    bf16 operand rounding => looser tolerance vs. the f32 reference.
    out_bf16 = jax.block_until_ready(combined_model(x, w1, b1, w2, b2))
    assert out_bf16.shape == (B, D_out)
    assert jnp.allclose(out_bf16, ref, atol=5e-2, rtol=5e-2)

    # 3) Ragged batch with NO host-side padding: B=130 with tm=128 -> grid=(2,),
    #    the last block has 2 valid rows and 126 masked rows.
    xr = x[:130]
    out_r = jax.block_until_ready(
        combined_model(xr, w1, b1, w2, b2, tm=128, mxu_dtype=None))
    assert out_r.shape == (130, D_out)
    assert jnp.allclose(out_r, _reference(xr, w1, b1, w2, b2),
                        atol=1e-4, rtol=1e-4)

    print("KERNEL_OK")
</pallas_src>

<mosaic_0001>
module attributes {stable_mosaic.version = 11 : i64} {
  func.func @_combined_kernel(%arg0: i32, %arg1: memref<128x256xf32, #tpu.memory_space<vmem>>, %arg2: memref<256x256xf32, #tpu.memory_space<vmem>>, %arg3: memref<1x256xf32, #tpu.memory_space<vmem>>, %arg4: memref<256x128xf32, #tpu.memory_space<vmem>>, %arg5: memref<1x128xf32, #tpu.memory_space<vmem>>, %arg6: memref<128x128xf32, #tpu.memory_space<vmem>>) attributes {dimension_semantics = [#tpu.dimension_semantics<parallel>], iteration_bounds = array<i64: 4>, scalar_prefetch = 0 : i64, scratch_operands = 0 : i64, tpu.core_type = #tpu.core_type<tc>, window_params = [{transform_indices = @transform_0, window_bounds = array<i64: 128, 256>}, {pipeline_mode = #tpu.pipeline_mode<synchronous>, transform_indices = @transform_1, window_bounds = array<i64: 256, 256>}, {pipeline_mode = #tpu.pipeline_mode<synchronous>, transform_indices = @transform_2, window_bounds = array<i64: 1, 256>}, {pipeline_mode = #tpu.pipeline_mode<synchronous>, transform_indices = @transform_3, window_bounds = array<i64: 256, 128>}, {pipeline_mode = #tpu.pipeline_mode<synchronous>, transform_indices = @transform_4, window_bounds = array<i64: 1, 128>}, {transform_indices = @transform_5, window_bounds = array<i64: 128, 128>}]} {
    %c0 = arith.constant 0 : index
    %c0_0 = arith.constant 0 : index
    %0 = vector.load %arg1[%c0, %c0_0] : memref<128x256xf32, #tpu.memory_space<vmem>>, vector<128x256xf32>
    %c0_1 = arith.constant 0 : index
    %c0_2 = arith.constant 0 : index
    %1 = vector.load %arg2[%c0_1, %c0_2] : memref<256x256xf32, #tpu.memory_space<vmem>>, vector<256x256xf32>
    %cst = arith.constant dense<0.000000e+00> : vector<128x256xf32>
    %2 = tpu.matmul %0, %1, %cst {dimension_numbers = #tpu.dot_dimension_numbers<[1], [0], [0], [1], [0, 0, 1, 1], [], []>} : vector<128x256xf32>, vector<256x256xf32>, vector<128x256xf32> -> vector<128x256xf32>
    %c0_3 = arith.constant 0 : index
    %c0_4 = arith.constant 0 : index
    %3 = vector.load %arg3[%c0_3, %c0_4] : memref<1x256xf32, #tpu.memory_space<vmem>>, vector<1x256xf32>
    %4 = vector.broadcast %3 : vector<1x256xf32> to vector<128x256xf32>
    %5 = arith.addf %2, %4 : vector<128x256xf32>
    %cst_5 = arith.constant 0.000000e+00 : f32
    %6 = vector.broadcast %cst_5 : f32 to vector<128x256xf32>
    %7 = arith.maximumf %5, %6 : vector<128x256xf32>
    %c0_6 = arith.constant 0 : index
    %c0_7 = arith.constant 0 : index
    %8 = vector.load %arg4[%c0_6, %c0_7] : memref<256x128xf32, #tpu.memory_space<vmem>>, vector<256x128xf32>
    %cst_8 = arith.constant dense<0.000000e+00> : vector<128x128xf32>
    %9 = tpu.matmul %7, %8, %cst_8 {dimension_numbers = #tpu.dot_dimension_numbers<[1], [0], [0], [1], [0, 0, 1, 1], [], []>} : vector<128x256xf32>, vector<256x128xf32>, vector<128x128xf32> -> vector<128x128xf32>
    %c0_9 = arith.constant 0 : index
    %c0_10 = arith.constant 0 : index
    %10 = vector.load %arg5[%c0_9, %c0_10] : memref<1x128xf32, #tpu.memory_space<vmem>>, vector<1x128xf32>
    %11 = vector.broadcast %10 : vector<1x128xf32> to vector<128x128xf32>
    %12 = arith.addf %9, %11 : vector<128x128xf32>
    %c0_11 = arith.constant 0 : index
    %c0_12 = arith.constant 0 : index
    %13 = vector.load %arg6[%c0_11, %c0_12] : memref<128x128xf32, #tpu.memory_space<vmem>>, vector<128x128xf32>
    tpu.vector_store %arg6[%c0_11, %c0_12], %12 {strides = array<i32>} : memref<128x128xf32, #tpu.memory_space<vmem>>, vector<128x128xf32>,
    return
  }
  func.func @transform_0(%arg0: i32) -> (i32, i32) {
    %c0_i32 = arith.constant 0 : i32
    %c0_i32_0 = arith.constant 0 : i32
    return %arg0, %c0_i32 : i32, i32
  }
  func.func @transform_1(%arg0: i32) -> (i32, i32) {
    %c0_i32 = arith.constant 0 : i32
    %c0_i32_0 = arith.constant 0 : i32
    %c0_i32_1 = arith.constant 0 : i32
    return %c0_i32, %c0_i32_0 : i32, i32
  }
  func.func @transform_2(%arg0: i32) -> (i32, i32) {
    %c0_i32 = arith.constant 0 : i32
    %c0_i32_0 = arith.constant 0 : i32
    %c0_i32_1 = arith.constant 0 : i32
    return %c0_i32, %c0_i32_0 : i32, i32
  }
  func.func @transform_3(%arg0: i32) -> (i32, i32) {
    %c0_i32 = arith.constant 0 : i32
    %c0_i32_0 = arith.constant 0 : i32
    %c0_i32_1 = arith.constant 0 : i32
    return %c0_i32, %c0_i32_0 : i32, i32
  }
  func.func @transform_4(%arg0: i32) -> (i32, i32) {
    %c0_i32 = arith.constant 0 : i32
    %c0_i32_0 = arith.constant 0 : i32
    %c0_i32_1 = arith.constant 0 : i32
    return %c0_i32, %c0_i32_0 : i32, i32
  }
  func.func @transform_5(%arg0: i32) -> (i32, i32) {
    %c0_i32 = arith.constant 0 : i32
    %c0_i32_0 = arith.constant 0 : i32
    return %arg0, %c0_i32 : i32, i32
  }
}

module attributes {stable_mosaic.version = 11 : i64} {
  func.func @_combined_kernel(%arg0: i32, %arg1: memref<128x256xf32, #tpu.memory_space<vmem>>, %arg2: memref<256x256xf32, #tpu.memory_space<vmem>>, %arg3: memref<1x256xf32, #tpu.memory_space<vmem>>, %arg4: memref<256x128xf32, #tpu.memory_space<vmem>>, %arg5: memref<1x128xf32, #tpu.memory_space<vmem>>, %arg6: memref<128x128xf32, #tpu.memory_space<vmem>>) attributes {dimension_semantics = [#tpu.dimension_semantics<parallel>], iteration_bounds = array<i64: 4>, scalar_prefetch = 0 : i64, scratch_operands = 0 : i64, tpu.core_type = #tpu.core_type<tc>, window_params = [{transform_indices = @transform_0, window_bounds = array<i64: 128, 256>}, {pipeline_mode = #tpu.pipeline_mode<synchronous>, transform_indices = @transform_1, window_bounds = array<i64: 256, 256>}, {pipeline_mode = #tpu.pipeline_mode<synchronous>, transform_indices = @transform_2, window_bounds = array<i64: 1, 256>}, {pipeline_mode = #tpu.pipeline_mode<synchronous>, transform_indices = @transform_3, window_bounds = array<i64: 256, 128>}, {pipeline_mode = #tpu.pipeline_mode<synchronous>, transform_indices = @transform_4, window_bounds = array<i64: 1, 128>}, {transform_indices = @transform_5, window_bounds = array<i64: 128, 128>}]} {
    %c0 = arith.constant 0 : index
    %c0_0 = arith.constant 0 : index
    %0 = vector.load %arg1[%c0, %c0_0] : memref<128x256xf32, #tpu.memory_space<vmem>>, vector<128x256xf32>
    %c0_1 = arith.constant 0 : index
    %c0_2 = arith.constant 0 : index
    %1 = vector.load %arg2[%c0_1, %c0_2] : memref<256x256xf32, #tpu.memory_space<vmem>>, vector<256x256xf32>
    %cst = arith.constant dense<0.000000e+00> : vector<128x256xf32>
    %2 = tpu.matmul %0, %1, %cst {dimension_numbers = #tpu.dot_dimension_numbers<[1], [0], [0], [1], [0, 0, 1, 1], [], []>} : vector<128x256xf32>, vector<256x256xf32>, vector<128x256xf32> -> vector<128x256xf32>
    %c0_3 = arith.constant 0 : index
    %c0_4 = arith.constant 0 : index
    %3 = vector.load %arg3[%c0_3, %c0_4] : memref<1x256xf32, #tpu.memory_space<vmem>>, vector<1x256xf32>
    %4 = vector.broadcast %3 : vector<1x256xf32> to vector<128x256xf32>
    %5 = arith.addf %2, %4 : vector<128x256xf32>
    %cst_5 = arith.constant 0.000000e+00 : f32
    %6 = vector.broadcast %cst_5 : f32 to vector<128x256xf32>
    %7 = arith.maximumf %5, %6 : vector<128x256xf32>
    %c0_6 = arith.constant 0 : index
    %c0_7 = arith.constant 0 : index
    %8 = vector.load %arg4[%c0_6, %c0_7] : memref<256x128xf32, #tpu.memory_space<vmem>>, vector<256x128xf32>
    %cst_8 = arith.constant dense<0.000000e+00> : vector<128x128xf32>
    %9 = tpu.matmul %7, %8, %cst_8 {dimension_numbers = #tpu.dot_dimension_numbers<[1], [0], [0], [1], [0, 0, 1, 1], [], []>} : vector<128x256xf32>, vector<256x128xf32>, vector<128x128xf32> -> vector<128x128xf32>
    %c0_9 = arith.constant 0 : index
    %c0_10 = arith.constant 0 : index
    %10 = vector.load %arg5[%c0_9, %c0_10] : memref<1x128xf32, #tpu.memory_space<vmem>>, vector<1x128xf32>
    %11 = vector.broadcast %10 : vector<1x128xf32> to vector<128x128xf32>
    %12 = arith.addf %9, %11 : vector<128x128xf32>
    %c0_11 = arith.constant 0 : index
    %c0_12 = arith.constant 0 : index
    %13 = vector.load %arg6[%c0_11, %c0_12] : memref<128x128xf32, #tpu.memory_space<vmem>>, vector<128x128xf32>
    tpu.vector_store %arg6[%c0_11, %c0_12], %12 {strides = array<i32>} : memref<128x128xf32, #tpu.memory_space<vmem>>, vector<128x128xf32>,
    return
  }
  func.func @transform_0(%arg0: i32) -> (i32, i32) {
    %c0_i32 = arith.constant 0 : i32
    %c0_i32_0 = arith.constant 0 : i32
    return %arg0, %c0_i32 : i32, i32
  }
  func.func @transform_1(%arg0: i32) -> (i32, i32) {
    %c0_i32 = arith.constant 0 : i32
    %c0_i32_0 = arith.constant 0 : i32
    %c0_i32_1 = arith.constant 0 : i32
    return %c0_i32, %c0_i32_0 : i32, i32
  }
  func.func @transform_2(%arg0: i32) -> (i32, i32) {
    %c0_i32 = arith.constant 0 : i32
    %c0_i32_0 = arith.constant 0 : i32
    %c0_i32_1 = arith.constant 0 : i32
    return %c0_i32, %c0_i32_0 : i32, i32
  }
  func.func @transform_3(%arg0: i32) -> (i32, i32) {
    %c0_i32 = arith.constant 0 : i32
    %c0_i32_0 = arith.constant 0 : i32
    %c0_i32_1 = arith.constant 0 : i32
    return %c0_i32, %c0_i32_0 : i32, i32
  }
  func.func @transform_4(%arg0: i32) -> (i32, i32) {
    %c0_i32 = arith.constant 0 : i32
    %c0_i32_0 = arith.constant 0 : i32
    %c0_i32_1 = arith.constant 0 : i32
    return %c0_i32, %c0_i32_0 : i32, i32
  }
  func.func @transform_5(%arg0: i32) -> (i32, i32) {
    %c0_i32 = arith.constant 0 : i32
    %c0_i32_0 = arith.constant 0 : i32
    return %arg0, %c0_i32 : i32, i32
  }
}

</mosaic_0001>

<llo_original>
// kernel: tpu_custom_call.1
$region0: #{tpu_custom_call.1}
  #allocation0 [shape = 'u32[]', space=smem, size = 0x4, offset = 0x4, fixed_abs, tag = 'smem constant byte address 0x4 - core index']
  #allocation1 [shape = 'u32[72,128]{1,0:T(1,128)}', space=vmem, size = 0x9000, scoped, tag = 'internal scratch']
  %s0 = inlined_call_operand.hbm [shape: f32[512,256], index: 0, kind: input, shape index: {}]
  %s1 = inlined_call_operand.hbm [shape: f32[256,256], index: 1, kind: input, shape index: {}]
  %s2 = inlined_call_operand.hbm [shape: f32[1,256], index: 2, kind: input, shape index: {}]
  %s3 = inlined_call_operand.hbm [shape: f32[256,128], index: 3, kind: input, shape index: {}]
  %s4 = inlined_call_operand.vmem [shape: f32[1,128], index: 4, kind: input, shape index: {}]
  %s5 = inlined_call_operand.hbm [shape: f32[512,128], index: 5, kind: output, shape index: {}]
  %s6 = sld [smem:[#allocation0]]
  $region69: #{tpu_custom_call.1} parent=0
    _
  %s8 = ssub.s32 1, %s6
  %s9 = scalar_select 0, %s8, %s6
  $region1: #{tpu_custom_call.1} parent=0
    #allocation2 [shape = 'u8[262144]{0}', space=vmem, size = 0x40000, scoped, tag = 'input window, operand 0']
    #allocation3 [shape = 's32[2]{0}', space=sflag, size = 0x8, scoped, tag = 'scoped memory for tpu_custom_call.1']
    #allocation4 [shape = 's32[2]{0}', space=sflag, size = 0x8, scoped, tag = 'scoped memory for tpu_custom_call.1']
    #allocation5 [shape = 'u8[262144]{0}', space=vmem, size = 0x40000, scoped, tag = 'input window, operand 1, single buffered']
    #allocation6 [shape = 's32[1]{0}', space=sflag, size = 0x4, scoped, tag = 'scoped memory for tpu_custom_call.1']
    #allocation7 [shape = 'u8[1024]{0}', space=vmem, size = 0x400, scoped, tag = 'input window, operand 2, single buffered']
    #allocation8 [shape = 'u8[131072]{0}', space=vmem, size = 0x20000, scoped, tag = 'input window, operand 3, single buffered']
    #allocation9 [shape = 's32[1]{0}', space=sflag, size = 0x4, scoped, tag = 'scoped memory for tpu_custom_call.1']
    #allocation10 [shape = 'u8[131072]{0}', space=vmem, size = 0x20000, scoped, tag = 'output window, operand 0']
    %10 = vsyncpa [#allocation3], 0
    %s11 = scalar_lea.sflag [#allocation3], 1
    %12 = vsyncpa %s11, 0
    %13 = vsyncpa [#allocation6], 0
    %14 = vsyncpa [#allocation9], 0
    %15 = vsyncpa [#allocation4], 0
    %s16 = scalar_lea.sflag [#allocation4], 1
    %17 = vsyncpa %s16, 0
    loop: start=0, step=1, limit=6
    $region2: #{tpu_custom_call.1} parent=1 // loop_pre_header
      _
    $region3: #{tpu_custom_call.1} parent=1 // loop_header
      %s19 = sphi 0, %s23
      %p20 = scmp.ge.s32.totalorder %s19, 6
      %s29 = sphi 0, %s31
      %s32 = sphi 0, %s29
      %s33 = sphi 0, %s32
      %s49 = sphi 0, %s33
      %s53 = sphi 0, %s53
      %s55 = sphi 0, %s53
      %s56 = sphi 0, %s55
      %s70 = sphi 0, %s56
      %s74 = sphi 0, %s74
      %s76 = sphi 0, %s74
      %s77 = sphi 0, %s76
      %s91 = sphi 0, %s77
      %s95 = sphi 0, %s95
      %s97 = sphi 0, %s95
      %s98 = sphi 0, %s97
      %s112 = sphi 0, %s98
      %s116 = sphi 0, %s116
      %s118 = sphi 0, %s116
      %s119 = sphi 0, %s118
      %s133 = sphi 0, %s119
      %s139 = sphi 0, %s141
      %s142 = sphi 0, %s139
      %s143 = sphi 0, %s142
      %s159 = sphi 0, %s143
    $region4: #{tpu_custom_call.1} parent=1 // loop_header_branch
      %22 = sbr.rel (%p20) target = $region8
    $region5: #{tpu_custom_call.1} parent=1 // loop_body
      %s24 = ssub.s32 %s19, 1
      %s25 = ssub.s32 %s19, 2
      %s26 = sadd.s32 %s19, 1
      %s27 = ssub.s32 %s19, %s26
      %p28 = scmp.eq.s32.totalorder %s27, 0
      %s30 = sadd.s32 %s29, 1
      %s31 = scalar_select %p28, %s29, %s30
      %p34 = pneg %p28
      %p35 = scmp.eq.s32.totalorder %s19, 3
      %p36 = por %p34, %p35
      %p37 = scmp.ne.s32.totalorder %s29, %s32
      %p38 = scmp.eq.s32.totalorder %s19, 0
      %p39 = por %p37, %p38
      %p40 = scmp.ne.s32.totalorder %s29, %s32
      %p41 = scmp.eq.s32.totalorder %s24, 3
      %p42 = por %p40, %p41
      %p43 = scmp.ne.s32.totalorder %s32, %s33
      %p44 = scmp.eq.s32.totalorder %s24, 0
      %p45 = por %p43, %p44
      %p46 = scmp.ne.s32.totalorder %s32, %s33
      %p47 = scmp.eq.s32.totalorder %s25, 3
      %p48 = por %p46, %p47
      %p50 = scmp.ne.s32.totalorder %s33, %s49
      %p51 = scmp.eq.s32.totalorder %s25, 0
      %p52 = por %p50, %p51
      %s54 = sadd.s32 %s53, 1
      %p57 = scmp.eq.s32.totalorder %s19, 3
      %p58 = scmp.ne.s32.totalorder %s53, %s55
      %p59 = scmp.eq.s32.totalorder %s19, 0
      %p60 = por %p58, %p59
      %p61 = scmp.ne.s32.totalorder %s53, %s55
      %p62 = scmp.eq.s32.totalorder %s24, 3
      %p63 = por %p61, %p62
      %p64 = scmp.ne.s32.totalorder %s55, %s56
      %p65 = scmp.eq.s32.totalorder %s24, 0
      %p66 = por %p64, %p65
      %p67 = scmp.ne.s32.totalorder %s55, %s56
      %p68 = scmp.eq.s32.totalorder %s25, 3
      %p69 = por %p67, %p68
      %p71 = scmp.ne.s32.totalorder %s56, %s70
      %p72 = scmp.eq.s32.totalorder %s25, 0
      %p73 = por %p71, %p72
      %s75 = sadd.s32 %s74, 1
      %p78 = scmp.eq.s32.totalorder %s19, 3
      %p79 = scmp.ne.s32.totalorder %s74, %s76
      %p80 = scmp.eq.s32.totalorder %s19, 0
      %p81 = por %p79, %p80
      %p82 = scmp.ne.s32.totalorder %s74, %s76
      %p83 = scmp.eq.s32.totalorder %s24, 3
      %p84 = por %p82, %p83
      %p85 = scmp.ne.s32.totalorder %s76, %s77
      %p86 = scmp.eq.s32.totalorder %s24, 0
      %p87 = por %p85, %p86
      %p88 = scmp.ne.s32.totalorder %s76, %s77
      %p89 = scmp.eq.s32.totalorder %s25, 3
      %p90 = por %p88, %p89
      %p92 = scmp.ne.s32.totalorder %s77, %s91
      %p93 = scmp.eq.s32.totalorder %s25, 0
      %p94 = por %p92, %p93
      %s96 = sadd.s32 %s95, 1
      %p99 = scmp.eq.s32.totalorder %s19, 3
      %p100 = scmp.ne.s32.totalorder %s95, %s97
      %p101 = scmp.eq.s32.totalorder %s19, 0
      %p102 = por %p100, %p101
      %p103 = scmp.ne.s32.totalorder %s95, %s97
      %p104 = scmp.eq.s32.totalorder %s24, 3
      %p105 = por %p103, %p104
      %p106 = scmp.ne.s32.totalorder %s97, %s98
      %p107 = scmp.eq.s32.totalorder %s24, 0
      %p108 = por %p106, %p107
      %p109 = scmp.ne.s32.totalorder %s97, %s98
      %p110 = scmp.eq.s32.totalorder %s25, 3
      %p111 = por %p109, %p110
      %p113 = scmp.ne.s32.totalorder %s98, %s112
      %p114 = scmp.eq.s32.totalorder %s25, 0
      %p115 = por %p113, %p114
      %s117 = sadd.s32 %s116, 1
      %p120 = scmp.eq.s32.totalorder %s19, 3
      %p121 = scmp.ne.s32.totalorder %s116, %s118
      %p122 = scmp.eq.s32.totalorder %s19, 0
      %p123 = por %p121, %p122
      %p124 = scmp.ne.s32.totalorder %s116, %s118
      %p125 = scmp.eq.s32.totalorder %s24, 3
      %p126 = por %p124, %p125
      %p127 = scmp.ne.s32.totalorder %s118, %s119
      %p128 = scmp.eq.s32.totalorder %s24, 0
      %p129 = por %p127, %p128
      %p130 = scmp.ne.s32.totalorder %s118, %s119
      %p131 = scmp.eq.s32.totalorder %s25, 3
      %p132 = por %p130, %p131
      %p134 = scmp.ne.s32.totalorder %s119, %s133
      %p135 = scmp.eq.s32.totalorder %s25, 0
      %p136 = por %p134, %p135
      %s137 = ssub.s32 %s19, %s26
      %p138 = scmp.eq.s32.totalorder %s137, 0
      %s140 = sadd.s32 %s139, 1
      %s141 = scalar_select %p138, %s139, %s140
      %p144 = pneg %p138
      %p145 = scmp.eq.s32.totalorder %s19, 3
      %p146 = por %p144, %p145
      %p147 = scmp.ne.s32.totalorder %s139, %s142
      %p148 = scmp.eq.s32.totalorder %s19, 0
      %p149 = por %p147, %p148
      %p150 = scmp.ne.s32.totalorder %s139, %s142
      %p151 = scmp.eq.s32.totalorder %s24, 3
      %p152 = por %p150, %p151
      %p153 = scmp.ne.s32.totalorder %s142, %s143
      %p154 = scmp.eq.s32.totalorder %s24, 0
      %p155 = por %p153, %p154
      %p156 = scmp.ne.s32.totalorder %s142, %s143
      %p157 = scmp.eq.s32.totalorder %s25, 3
      %p158 = por %p156, %p157
      %p160 = scmp.ne.s32.totalorder %s143, %s159
      %p161 = scmp.eq.s32.totalorder %s25, 0
      %p162 = por %p160, %p161
      %p163 = scmp.le.s32.totalorder 1, %s19
      %p164 = scmp.lt.s32.totalorder %s19, 5
      %p165 = pnand %p163, %p164
      %p166 = pneg %p165
      // Predicated region
      $region9: #{tpu_custom_call.1} parent=5 // pred_check
        _
      $region10: #{tpu_custom_call.1} parent=5 // pred_check_branch
        %168 = sbr.rel (%p165) target = $region12
      $region11: #{tpu_custom_call.1} parent=5 // pred_region
        %s169 = ssub.s32 %s19, 1
        // Predicated region
        $region13: #{tpu_custom_call.1} parent=11 // pred_check
          %p170 = pneg %p66
        $region14: #{tpu_custom_call.1} parent=11 // pred_check_branch
          %172 = sbr.rel (%p170) target = $region16
        $region15: #{tpu_custom_call.1} parent=11 // pred_region
          %174 = vsyncadd [#allocation6], 0
          %s175 = sshll.u32 %s1, 4
          %s176 = int_to_ptr.hbm [resolvable:$true] %s175
          %s177 = sshll.u32 [#allocation5], 4
          %s178 = int_to_ptr.vmem [resolvable:$true] %s177
          %183 = dma.hbm_to_vmem [thread:$0]  %s176, 8192, %s178, [#allocation6], 256, 256, 16
        $region16: #{tpu_custom_call.1} parent=11 // pred_fallthru
          _
        // Predicated region
        $region17: #{tpu_custom_call.1} parent=11 // pred_check
          %p184 = pneg %p87
        $region18: #{tpu_custom_call.1} parent=11 // pred_check_branch
          %186 = sbr.rel (%p184) target = $region20
        $region19: #{tpu_custom_call.1} parent=11 // pred_region
          %188 = vsyncadd [#allocation6], 0
          %s190 = sshll.u32 %s2, 4
          %s191 = int_to_ptr.hbm [resolvable:$true] %s190
          %s192 = sshll.u32 [#allocation7], 4
          %s193 = int_to_ptr.vmem [resolvable:$true] %s192
          %195 = dma.hbm_to_vmem [thread:$0]  %s191, 32, %s193, [#allocation6]
        $region20: #{tpu_custom_call.1} parent=11 // pred_fallthru
          _
        // Predicated region
        $region21: #{tpu_custom_call.1} parent=11 // pred_check
          %p196 = pneg %p108
        $region22: #{tpu_custom_call.1} parent=11 // pred_check_branch
          %198 = sbr.rel (%p196) target = $region24
        $region23: #{tpu_custom_call.1} parent=11 // pred_region
          %200 = vsyncadd [#allocation9], 0
          %s201 = sshll.u32 %s3, 4
          %s202 = int_to_ptr.hbm [resolvable:$true] %s201
          %s203 = sshll.u32 [#allocation8], 4
          %s204 = int_to_ptr.vmem [resolvable:$true] %s203
          %209 = dma.hbm_to_vmem [thread:$0]  %s202, 4096, %s204, [#allocation9], 128, 128, 8
        $region24: #{tpu_custom_call.1} parent=11 // pred_fallthru
          _
        // Predicated region
        $region25: #{tpu_custom_call.1} parent=11 // pred_check
          %p210 = pneg %p129
        $region26: #{tpu_custom_call.1} parent=11 // pred_check_branch
          %212 = sbr.rel (%p210) target = $region28
        $region27: #{tpu_custom_call.1} parent=11 // pred_region
          _
        $region28: #{tpu_custom_call.1} parent=11 // pred_fallthru
          _
      $region12: #{tpu_custom_call.1} parent=5 // pred_fallthru
        _
      %p213 = scmp.lt.s32.totalorder %s19, 4
      // Predicated region
      $region29: #{tpu_custom_call.1} parent=5 // pred_check
        %p214 = pneg %p213
      $region30: #{tpu_custom_call.1} parent=5 // pred_check_branch
        %216 = sbr.rel (%p214) target = $region32
      $region31: #{tpu_custom_call.1} parent=5 // pred_region
        // Predicated region
        $region33: #{tpu_custom_call.1} parent=31 // pred_check
          %p217 = pneg %p39
        $region34: #{tpu_custom_call.1} parent=31 // pred_check_branch
          %219 = sbr.rel (%p217) target = $region36
        $region35: #{tpu_custom_call.1} parent=31 // pred_region
          %s220 = sand.u32 %s29, 1
          %s221 = scalar_lea.sflag [#allocation3], %s220
          %s222 = sand.u32 %s29, 1
          %s223 = smul.addr %s222, 256
          %s224 = scalar_lea.vmem [#allocation2], %s223
          %s225 = smul.u32 16, %s19
          %227 = vsyncadd %s221, 0
          %s228 = smul.addr %s225, 2
          %s229 = smul.addr %s228, 8
          %s230 = scalar_lea.hbm %s0, %s229
          %s231 = sshll.u32 %s230, 4
          %s232 = int_to_ptr.hbm [resolvable:$true] %s231
          %s233 = sshll.u32 %s224, 4
          %s234 = int_to_ptr.vmem [resolvable:$true] %s233
          %239 = dma.hbm_to_vmem [thread:$0]  %s232, 4096, %s234, %s221, 256, 256, 16
        $region36: #{tpu_custom_call.1} parent=31 // pred_fallthru
          _
      $region32: #{tpu_custom_call.1} parent=5 // pred_fallthru
        _
      %p240 = scmp.le.s32.totalorder 1, %s19
      %p241 = scmp.lt.s32.totalorder %s19, 5
      %p242 = pnand %p240, %p241
      %p243 = pneg %p242
      // Predicated region
      $region37: #{tpu_custom_call.1} parent=5 // pred_check
        _
      $region38: #{tpu_custom_call.1} parent=5 // pred_check_branch
        %245 = sbr.rel (%p242) target = $region40
      $region39: #{tpu_custom_call.1} parent=5 // pred_region
        %s246 = ssub.s32 %s19, 1
        %s247 = sand.u32 %s32, 1
        %s248 = scalar_lea.sflag [#allocation3], %s247
        %s249 = sand.u32 %s32, 1
        %s250 = smul.addr %s249, 256
        %s251 = scalar_lea.vmem [#allocation2], %s250
        // Predicated region
        $region41: #{tpu_custom_call.1} parent=39 // pred_check
          %p252 = pneg %p45
        $region42: #{tpu_custom_call.1} parent=39 // pred_check_branch
          %254 = sbr.rel (%p252) target = $region44
        $region43: #{tpu_custom_call.1} parent=39 // pred_region
          %256 = dma.done %s248, 4096
        $region44: #{tpu_custom_call.1} parent=39 // pred_fallthru
          _
        // Predicated region
        $region45: #{tpu_custom_call.1} parent=39 // pred_check
          %p257 = pneg %p66
        $region46: #{tpu_custom_call.1} parent=39 // pred_check_branch
          %259 = sbr.rel (%p257) target = $region48
        $region47: #{tpu_custom_call.1} parent=39 // pred_region
          %261 = dma.done [#allocation6], 8192
        $region48: #{tpu_custom_call.1} parent=39 // pred_fallthru
          _
        // Predicated region
        $region49: #{tpu_custom_call.1} parent=39 // pred_check
          %p262 = pneg %p87
        $region50: #{tpu_custom_call.1} parent=39 // pred_check_branch
          %264 = sbr.rel (%p262) target = $region52
        $region51: #{tpu_custom_call.1} parent=39 // pred_region
          %266 = dma.done [#allocation6], 32
        $region52: #{tpu_custom_call.1} parent=39 // pred_fallthru
          _
        // Predicated region
        $region53: #{tpu_custom_call.1} parent=39 // pred_check
          %p267 = pneg %p108
        $region54: #{tpu_custom_call.1} parent=39 // pred_check_branch
          %269 = sbr.rel (%p267) target = $region56
        $region55: #{tpu_custom_call.1} parent=39 // pred_region
          %271 = dma.done [#allocation9], 4096
        $region56: #{tpu_custom_call.1} parent=39 // pred_fallthru
          _
        %s272 = sand.u32 %s32, 1
        %s273 = scalar_lea.sflag [#allocation3], %s272
        %s274 = sand.u32 %s32, 1
        %s275 = smul.addr %s274, 256
        %s276 = scalar_lea.vmem [#allocation2], %s275
        %p277 = pneg %p45
        %p278 = pneg %p42
        %p279 = pneg %p66
        %p280 = pneg %p63
        %p281 = pneg %p87
        %p282 = pneg %p84
        %p283 = pneg %p108
        %p284 = pneg %p105
        %p285 = pneg %p129
        %p286 = pneg %p126
        %p287 = pneg %p155
        %p288 = pneg %p152
        %s289 = sand.u32 %s142, 1
        %s290 = scalar_lea.sflag [#allocation4], %s289
        %s291 = sand.u32 %s142, 1
        %s292 = smul.addr %s291, 128
        %s293 = scalar_lea.vmem [#allocation10], %s292
        %s294 = smul.u32 16, %s24
        %s295 = smul.u32 16, %s24
        %v296 = vld [vmem:[%s251] sm:$0xff]
        %v297 = vld [vmem:[%s251 + $0x8] sm:$0xff]
        %v298 = vld [vmem:[%s251 + $0x10] sm:$0xff]
        %v299 = vld [vmem:[%s251 + $0x18] sm:$0xff]
        %v300 = vld [vmem:[%s251 + $0x20] sm:$0xff]
        %v301 = vld [vmem:[%s251 + $0x28] sm:$0xff]
        %v302 = vld [vmem:[%s251 + $0x30] sm:$0xff]
        %v303 = vld [vmem:[%s251 + $0x38] sm:$0xff]
        %v304 = vld [vmem:[%s251 + $0x40] sm:$0xff]
        %v305 = vld [vmem:[%s251 + $0x48] sm:$0xff]
        %v306 = vld [vmem:[%s251 + $0x50] sm:$0xff]
        %v307 = vld [vmem:[%s251 + $0x58] sm:$0xff]
        %v308 = vld [vmem:[%s251 + $0x60] sm:$0xff]
        %v309 = vld [vmem:[%s251 + $0x68] sm:$0xff]
        %v310 = vld [vmem:[%s251 + $0x70] sm:$0xff]
        %v311 = vld [vmem:[%s251 + $0x78] sm:$0xff]
        %v312 = vld [vmem:[%s251 + $0x80] sm:$0xff]
        %v313 = vld [vmem:[%s251 + $0x88] sm:$0xff]
        %v314 = vld [vmem:[%s251 + $0x90] sm:$0xff]
        %v315 = vld [vmem:[%s251 + $0x98] sm:$0xff]
        %v316 = vld [vmem:[%s251 + $0xa0] sm:$0xff]
        %v317 = vld [vmem:[%s251 + $0xa8] sm:$0xff]
        %v318 = vld [vmem:[%s251 + $0xb0] sm:$0xff]
        %v319 = vld [vmem:[%s251 + $0xb8] sm:$0xff]
        %v320 = vld [vmem:[%s251 + $0xc0] sm:$0xff]
        %v321 = vld [vmem:[%s251 + $0xc8] sm:$0xff]
        %v322 = vld [vmem:[%s251 + $0xd0] sm:$0xff]
        %v323 = vld [vmem:[%s251 + $0xd8] sm:$0xff]
        %v324 = vld [vmem:[%s251 + $0xe0] sm:$0xff]
        %v325 = vld [vmem:[%s251 + $0xe8] sm:$0xff]
        %v326 = vld [vmem:[%s251 + $0xf0] sm:$0xff]
        %v327 = vld [vmem:[%s251 + $0xf8] sm:$0xff]
        %v328 = vld [vmem:[#allocation5] sm:$0xff]
        %v329 = vld [vmem:[#allocation5 + $0x8] sm:$0xff]
        %v330 = vld [vmem:[#allocation5 + $0x10] sm:$0xff]
        %v331 = vld [vmem:[#allocation5 + $0x18] sm:$0xff]
        %v332 = vld [vmem:[#allocation5 + $0x20] sm:$0xff]
        %v333 = vld [vmem:[#allocation5 + $0x28] sm:$0xff]
        %v334 = vld [vmem:[#allocation5 + $0x30] sm:$0xff]
        %v335 = vld [vmem:[#allocation5 + $0x38] sm:$0xff]
        %v336 = vld [vmem:[#allocation5 + $0x40] sm:$0xff]
        %v337 = vld [vmem:[#allocation5 + $0x48] sm:$0xff]
        %v338 = vld [vmem:[#allocation5 + $0x50] sm:$0xff]
        %v339 = vld [vmem:[#allocation5 + $0x58] sm:$0xff]
        %v340 = vld [vmem:[#allocation5 + $0x60] sm:$0xff]
        %v341 = vld [vmem:[#allocation5 + $0x68] sm:$0xff]
        %v342 = vld [vmem:[#allocation5 + $0x70] sm:$0xff]
        %v343 = vld [vmem:[#allocation5 + $0x78] sm:$0xff]
        %v344 = vld [vmem:[#allocation5 + $0x80] sm:$0xff]
        %v345 = vld [vmem:[#allocation5 + $0x88] sm:$0xff]
        %v346 = vld [vmem:[#allocation5 + $0x90] sm:$0xff]
        %v347 = vld [vmem:[#allocation5 + $0x98] sm:$0xff]
        %v348 = vld [vmem:[#allocation5 + $0xa0] sm:$0xff]
        %v349 = vld [vmem:[#allocation5 + $0xa8] sm:$0xff]
        %v350 = vld [vmem:[#allocation5 + $0xb0] sm:$0xff]
        %v351 = vld [vmem:[#allocation5 + $0xb8] sm:$0xff]
        %v352 = vld [vmem:[#allocation5 + $0xc0] sm:$0xff]
        %v353 = vld [vmem:[#allocation5 + $0xc8] sm:$0xff]
        %v354 = vld [vmem:[#allocation5 + $0xd0] sm:$0xff]
        %v355 = vld [vmem:[#allocation5 + $0xd8] sm:$0xff]
        %v356 = vld [vmem:[#allocation5 + $0xe0] sm:$0xff]
        %v357 = vld [vmem:[#allocation5 + $0xe8] sm:$0xff]
        %v358 = vld [vmem:[#allocation5 + $0xf0] sm:$0xff]
        %v359 = vld [vmem:[#allocation5 + $0xf8] sm:$0xff]
        %v360 = vld [vmem:[#allocation5 + $0x100] sm:$0xff]
        %v361 = vld [vmem:[#allocation5 + $0x108] sm:$0xff]
        %v362 = vld [vmem:[#allocation5 + $0x110] sm:$0xff]
        %v363 = vld [vmem:[#allocation5 + $0x118] sm:$0xff]
        %v364 = vld [vmem:[#allocation5 + $0x120] sm:$0xff]
        %v365 = vld [vmem:[#allocation5 + $0x128] sm:$0xff]
        %v366 = vld [vmem:[#allocation5 + $0x130] sm:$0xff]
        %v367 = vld [vmem:[#allocation5 + $0x138] sm:$0xff]
        %v368 = vld [vmem:[#allocation5 + $0x140] sm:$0xff]
        %v369 = vld [vmem:[#allocation5 + $0x148] sm:$0xff]
        %v370 = vld [vmem:[#allocation5 + $0x150] sm:$0xff]
        %v371 = vld [vmem:[#allocation5 + $0x158] sm:$0xff]
        %v372 = vld [vmem:[#allocation5 + $0x160] sm:$0xff]
        %v373 = vld [vmem:[#allocation5 + $0x168] sm:$0xff]
        %v374 = vld [vmem:[#allocation5 + $0x170] sm:$0xff]
        %v375 = vld [vmem:[#allocation5 + $0x178] sm:$0xff]
        %v376 = vld [vmem:[#allocation5 + $0x180] sm:$0xff]
        %v377 = vld [vmem:[#allocation5 + $0x188] sm:$0xff]
        %v378 = vld [vmem:[#allocation5 + $0x190] sm:$0xff]
        %v379 = vld [vmem:[#allocation5 + $0x198] sm:$0xff]
        %v380 = vld [vmem:[#allocation5 + $0x1a0] sm:$0xff]
        %v381 = vld [vmem:[#allocation5 + $0x1a8] sm:$0xff]
        %v382 = vld [vmem:[#allocation5 + $0x1b0] sm:$0xff]
        %v383 = vld [vmem:[#allocation5 + $0x1b8] sm:$0xff]
        %v384 = vld [vmem:[#allocation5 + $0x1c0] sm:$0xff]
        %v385 = vld [vmem:[#allocation5 + $0x1c8] sm:$0xff]
        %v386 = vld [vmem:[#allocation5 + $0x1d0] sm:$0xff]
        %v387 = vld [vmem:[#allocation5 + $0x1d8] sm:$0xff]
        %v388 = vld [vmem:[#allocation5 + $0x1e0] sm:$0xff]
        %v389 = vld [vmem:[#allocation5 + $0x1e8] sm:$0xff]
        %v390 = vld [vmem:[#allocation5 + $0x1f0] sm:$0xff]
        %v391 = vld [vmem:[#allocation5 + $0x1f8] sm:$0xff]
        %v392 = vld [vmem:[#allocation7] sm:$0x3]
        %v394 = vperm.slane %v392, 0
        %v395 = vperm.slane %v392, 1
        %398 = vmatpush.msra.mxu0 %v358
        %399 = vmatpush.msra.mxu0 %v356
        %400 = vmatpush.msra.mxu0 %v354
        %401 = vmatpush.msra.mxu0 %v352
        %402 = vmatpush.msra.mxu0 %v350
        %403 = vmatpush.msra.mxu0 %v348
        %404 = vmatpush.msra.mxu0 %v346
        %405 = vmatpush.msra.mxu0 %v344
        %406 = vmatpush.msra.mxu0 %v342
        %407 = vmatpush.msra.mxu0 %v340
        %408 = vmatpush.msra.mxu0 %v338
        %409 = vmatpush.msra.mxu0 %v336
        %410 = vmatpush.msra.mxu0 %v334
        %411 = vmatpush.msra.mxu0 %v332
        %412 = vmatpush.msra.mxu0 %v330
        %413 = vmatpush.msra.mxu0 %v328
        %414 = vmatmul.f32.gmra.mxu0 %v296
        %v415 = vpop.f32.mrf.mxu0
        %v416 = vadd.f32 %v394, %v415
        %417 = vmatmul.f32.gmra.mxu0 %v298
        %v418 = vpop.f32.mrf.mxu0
        %v419 = vadd.f32 %v394, %v418
        %420 = vmatmul.f32.gmra.mxu0 %v300
        %v421 = vpop.f32.mrf.mxu0
        %v422 = vadd.f32 %v394, %v421
        %423 = vmatmul.f32.gmra.mxu0 %v302
        %v424 = vpop.f32.mrf.mxu0
        %v425 = vadd.f32 %v394, %v424
        %426 = vmatmul.f32.gmra.mxu0 %v304
        %v427 = vpop.f32.mrf.mxu0
        %v428 = vadd.f32 %v394, %v427
        %429 = vmatmul.f32.gmra.mxu0 %v306
        %v430 = vpop.f32.mrf.mxu0
        %v431 = vadd.f32 %v394, %v430
        %432 = vmatmul.f32.gmra.mxu0 %v308
        %v433 = vpop.f32.mrf.mxu0
        %v434 = vadd.f32 %v394, %v433
        %435 = vmatmul.f32.gmra.mxu0 %v310
        %v436 = vpop.f32.mrf.mxu0
        %v437 = vadd.f32 %v394, %v436
        %438 = vmatmul.f32.gmra.mxu0 %v312
        %v439 = vpop.f32.mrf.mxu0
        %v440 = vadd.f32 %v394, %v439
        %441 = vmatmul.f32.gmra.mxu0 %v314
        %v442 = vpop.f32.mrf.mxu0
        %v443 = vadd.f32 %v394, %v442
        %444 = vmatmul.f32.gmra.mxu0 %v316
        %v445 = vpop.f32.mrf.mxu0
        %v446 = vadd.f32 %v394, %v445
        %447 = vmatmul.f32.gmra.mxu0 %v318
        %v448 = vpop.f32.mrf.mxu0
        %v449 = vadd.f32 %v394, %v448
        %450 = vmatmul.f32.gmra.mxu0 %v320
        %v451 = vpop.f32.mrf.mxu0
        %v452 = vadd.f32 %v394, %v451
        %453 = vmatmul.f32.gmra.mxu0 %v322
        %v454 = vpop.f32.mrf.mxu0
        %v455 = vadd.f32 %v394, %v454
        %456 = vmatmul.f32.gmra.mxu0 %v324
        %v457 = vpop.f32.mrf.mxu0
        %v458 = vadd.f32 %v394, %v457
        %459 = vmatmul.f32.gmra.mxu0 %v326
        %v460 = vpop.f32.mrf.mxu0
        %v461 = vadd.f32 %v394, %v460
        %462 = vdwg.mxu0
        %463 = vmatpush.msra.mxu0 %v390
        %464 = vmatpush.msra.mxu0 %v388
        %465 = vmatpush.msra.mxu0 %v386
        %466 = vmatpush.msra.mxu0 %v384
        %467 = vmatpush.msra.mxu0 %v382
        %468 = vmatpush.msra.mxu0 %v380
        %469 = vmatpush.msra.mxu0 %v378
        %470 = vmatpush.msra.mxu0 %v376
        %471 = vmatpush.msra.mxu0 %v374
        %472 = vmatpush.msra.mxu0 %v372
        %473 = vmatpush.msra.mxu0 %v370
        %474 = vmatpush.msra.mxu0 %v368
        %475 = vmatpush.msra.mxu0 %v366
        %476 = vmatpush.msra.mxu0 %v364
        %477 = vmatpush.msra.mxu0 %v362
        %478 = vmatpush.msra.mxu0 %v360
        %479 = vmatmul.f32.gmra.mxu0 %v297
        %v480 = vpop.f32.mrf.mxu0
        %v481 = vadd.f32 %v416, %v480
        %482 = vmatmul.f32.gmra.mxu0 %v299
        %v483 = vpop.f32.mrf.mxu0
        %v484 = vadd.f32 %v419, %v483
        %485 = vmatmul.f32.gmra.mxu0 %v301
        %v486 = vpop.f32.mrf.mxu0
        %v487 = vadd.f32 %v422, %v486
        %488 = vmatmul.f32.gmra.mxu0 %v303
        %v489 = vpop.f32.mrf.mxu0
        %v490 = vadd.f32 %v425, %v489
        %491 = vmatmul.f32.gmra.mxu0 %v305
        %v492 = vpop.f32.mrf.mxu0
        %v493 = vadd.f32 %v428, %v492
        %494 = vmatmul.f32.gmra.mxu0 %v307
        %v495 = vpop.f32.mrf.mxu0
        %v496 = vadd.f32 %v431, %v495
        %497 = vmatmul.f32.gmra.mxu0 %v309
        %v498 = vpop.f32.mrf.mxu0
        %v499 = vadd.f32 %v434, %v498
        %500 = vmatmul.f32.gmra.mxu0 %v311
        %v501 = vpop.f32.mrf.mxu0
        %v502 = vadd.f32 %v437, %v501
        %503 = vmatmul.f32.gmra.mxu0 %v313
        %v504 = vpop.f32.mrf.mxu0
        %v505 = vadd.f32 %v440, %v504
        %506 = vmatmul.f32.gmra.mxu0 %v315
        %v507 = vpop.f32.mrf.mxu0
        %v508 = vadd.f32 %v443, %v507
        %509 = vmatmul.f32.gmra.mxu0 %v317
        %v510 = vpop.f32.mrf.mxu0
        %v511 = vadd.f32 %v446, %v510
        %512 = vmatmul.f32.gmra.mxu0 %v319
        %v513 = vpop.f32.mrf.mxu0
        %v514 = vadd.f32 %v449, %v513
        %515 = vmatmul.f32.gmra.mxu0 %v321
        %v516 = vpop.f32.mrf.mxu0
        %v517 = vadd.f32 %v452, %v516
        %518 = vmatmul.f32.gmra.mxu0 %v323
        %v519 = vpop.f32.mrf.mxu0
        %v520 = vadd.f32 %v455, %v519
        %521 = vmatmul.f32.gmra.mxu0 %v325
        %v522 = vpop.f32.mrf.mxu0
        %v523 = vadd.f32 %v458, %v522
        %524 = vmatmul.f32.gmra.mxu0 %v327
        %v525 = vpop.f32.mrf.mxu0
        %v526 = vadd.f32 %v461, %v525
        %527 = vdwg.mxu0
        %528 = vmatpush.msra.mxu0 %v359
        %529 = vmatpush.msra.mxu0 %v357
        %530 = vmatpush.msra.mxu0 %v355
        %531 = vmatpush.msra.mxu0 %v353
        %532 = vmatpush.msra.mxu0 %v351
        %533 = vmatpush.msra.mxu0 %v349
        %534 = vmatpush.msra.mxu0 %v347
        %535 = vmatpush.msra.mxu0 %v345
        %536 = vmatpush.msra.mxu0 %v343
        %537 = vmatpush.msra.mxu0 %v341
        %538 = vmatpush.msra.mxu0 %v339
        %539 = vmatpush.msra.mxu0 %v337
        %540 = vmatpush.msra.mxu0 %v335
        %541 = vmatpush.msra.mxu0 %v333
        %542 = vmatpush.msra.mxu0 %v331
        %543 = vmatpush.msra.mxu0 %v329
        %544 = vmatmul.f32.gmra.mxu0 %v296
        %v545 = vpop.f32.mrf.mxu0
        %v546 = vadd.f32 %v395, %v545
        %547 = vmatmul.f32.gmra.mxu0 %v298
        %v548 = vpop.f32.mrf.mxu0
        %v549 = vadd.f32 %v395, %v548
        %550 = vmatmul.f32.gmra.mxu0 %v300
        %v551 = vpop.f32.mrf.mxu0
        %v552 = vadd.f32 %v395, %v551
        %553 = vmatmul.f32.gmra.mxu0 %v302
        %v554 = vpop.f32.mrf.mxu0
        %v555 = vadd.f32 %v395, %v554
        %556 = vmatmul.f32.gmra.mxu0 %v304
        %v557 = vpop.f32.mrf.mxu0
        %v558 = vadd.f32 %v395, %v557
        %559 = vmatmul.f32.gmra.mxu0 %v306
        %v560 = vpop.f32.mrf.mxu0
        %v561 = vadd.f32 %v395, %v560
        %562 = vmatmul.f32.gmra.mxu0 %v308
        %v563 = vpop.f32.mrf.mxu0
        %v564 = vadd.f32 %v395, %v563
        %565 = vmatmul.f32.gmra.mxu0 %v310
        %v566 = vpop.f32.mrf.mxu0
        %v567 = vadd.f32 %v395, %v566
        %568 = vmatmul.f32.gmra.mxu0 %v312
        %v569 = vpop.f32.mrf.mxu0
        %v570 = vadd.f32 %v395, %v569
        %571 = vmatmul.f32.gmra.mxu0 %v314
        %v572 = vpop.f32.mrf.mxu0
        %v573 = vadd.f32 %v395, %v572
        %574 = vmatmul.f32.gmra.mxu0 %v316
        %v575 = vpop.f32.mrf.mxu0
        %v576 = vadd.f32 %v395, %v575
        %577 = vmatmul.f32.gmra.mxu0 %v318
        %v578 = vpop.f32.mrf.mxu0
        %v579 = vadd.f32 %v395, %v578
        %580 = vmatmul.f32.gmra.mxu0 %v320
        %v581 = vpop.f32.mrf.mxu0
        %v582 = vadd.f32 %v395, %v581
        %583 = vmatmul.f32.gmra.mxu0 %v322
        %v584 = vpop.f32.mrf.mxu0
        %v585 = vadd.f32 %v395, %v584
        %586 = vmatmul.f32.gmra.mxu0 %v324
        %v587 = vpop.f32.mrf.mxu0
        %v588 = vadd.f32 %v395, %v587
        %589 = vmatmul.f32.gmra.mxu0 %v326
        %v590 = vpop.f32.mrf.mxu0
        %v591 = vadd.f32 %v395, %v590
        %592 = vdwg.mxu0
        %593 = vmatpush.msra.mxu0 %v391
        %594 = vmatpush.msra.mxu0 %v389
        %595 = vmatpush.msra.mxu0 %v387
        %596 = vmatpush.msra.mxu0 %v385
        %597 = vmatpush.msra.mxu0 %v383
        %598 = vmatpush.msra.mxu0 %v381
        %599 = vmatpush.msra.mxu0 %v379
        %600 = vmatpush.msra.mxu0 %v377
        %601 = vmatpush.msra.mxu0 %v375
        %602 = vmatpush.msra.mxu0 %v373
        %603 = vmatpush.msra.mxu0 %v371
        %604 = vmatpush.msra.mxu0 %v369
        %605 = vmatpush.msra.mxu0 %v367
        %606 = vmatpush.msra.mxu0 %v365
        %607 = vmatpush.msra.mxu0 %v363
        %608 = vmatpush.msra.mxu0 %v361
        %609 = vmatmul.f32.gmra.mxu0 %v297
        %v610 = vpop.f32.mrf.mxu0
        %v611 = vadd.f32 %v546, %v610
        %612 = vmatmul.f32.gmra.mxu0 %v299
        %v613 = vpop.f32.mrf.mxu0
        %v614 = vadd.f32 %v549, %v613
        %615 = vmatmul.f32.gmra.mxu0 %v301
        %v616 = vpop.f32.mrf.mxu0
        %v617 = vadd.f32 %v552, %v616
        %618 = vmatmul.f32.gmra.mxu0 %v303
        %v619 = vpop.f32.mrf.mxu0
        %v620 = vadd.f32 %v555, %v619
        %621 = vmatmul.f32.gmra.mxu0 %v305
        %v622 = vpop.f32.mrf.mxu0
        %v623 = vadd.f32 %v558, %v622
        %624 = vmatmul.f32.gmra.mxu0 %v307
        %v625 = vpop.f32.mrf.mxu0
        %v626 = vadd.f32 %v561, %v625
        %627 = vmatmul.f32.gmra.mxu0 %v309
        %v628 = vpop.f32.mrf.mxu0
        %v629 = vadd.f32 %v564, %v628
        %630 = vmatmul.f32.gmra.mxu0 %v311
        %v631 = vpop.f32.mrf.mxu0
        %v632 = vadd.f32 %v567, %v631
        %633 = vmatmul.f32.gmra.mxu0 %v313
        %v634 = vpop.f32.mrf.mxu0
        %v635 = vadd.f32 %v570, %v634
        %636 = vmatmul.f32.gmra.mxu0 %v315
        %v637 = vpop.f32.mrf.mxu0
        %v638 = vadd.f32 %v573, %v637
        %639 = vmatmul.f32.gmra.mxu0 %v317
        %v640 = vpop.f32.mrf.mxu0
        %v641 = vadd.f32 %v576, %v640
        %642 = vmatmul.f32.gmra.mxu0 %v319
        %v643 = vpop.f32.mrf.mxu0
        %v644 = vadd.f32 %v579, %v643
        %645 = vmatmul.f32.gmra.mxu0 %v321
        %v646 = vpop.f32.mrf.mxu0
        %v647 = vadd.f32 %v582, %v646
        %648 = vmatmul.f32.gmra.mxu0 %v323
        %v649 = vpop.f32.mrf.mxu0
        %v650 = vadd.f32 %v585, %v649
        %651 = vmatmul.f32.gmra.mxu0 %v325
        %v652 = vpop.f32.mrf.mxu0
        %v653 = vadd.f32 %v588, %v652
        %654 = vmatmul.f32.gmra.mxu0 %v327
        %v655 = vpop.f32.mrf.mxu0
        %v656 = vadd.f32 %v591, %v655
        %657 = vdwg.mxu0
        %v658 = vmax.f32 %v481, 0.0
        %v659 = vmax.f32 %v611, 0.0
        %v660 = vmax.f32 %v484, 0.0
        %v661 = vmax.f32 %v614, 0.0
        %v662 = vmax.f32 %v487, 0.0
        %v663 = vmax.f32 %v617, 0.0
        %v664 = vmax.f32 %v490, 0.0
        %v665 = vmax.f32 %v620, 0.0
        %v666 = vmax.f32 %v493, 0.0
        %v667 = vmax.f32 %v623, 0.0
        %v668 = vmax.f32 %v496, 0.0
        %v669 = vmax.f32 %v626, 0.0
        %v670 = vmax.f32 %v499, 0.0
        %v671 = vmax.f32 %v629, 0.0
        %v672 = vmax.f32 %v502, 0.0
        %v673 = vmax.f32 %v632, 0.0
        %v674 = vmax.f32 %v505, 0.0
        %v675 = vmax.f32 %v635, 0.0
        %v676 = vmax.f32 %v508, 0.0
        %v677 = vmax.f32 %v638, 0.0
        %v678 = vmax.f32 %v511, 0.0
        %v679 = vmax.f32 %v641, 0.0
        %v680 = vmax.f32 %v514, 0.0
        %v681 = vmax.f32 %v644, 0.0
        %v682 = vmax.f32 %v517, 0.0
        %v683 = vmax.f32 %v647, 0.0
        %v684 = vmax.f32 %v520, 0.0
        %v685 = vmax.f32 %v650, 0.0
        %v686 = vmax.f32 %v523, 0.0
        %v687 = vmax.f32 %v653, 0.0
        %v688 = vmax.f32 %v526, 0.0
        %v689 = vmax.f32 %v656, 0.0
        %v690 = vld [vmem:[#allocation8] sm:$0xff]
        %v691 = vld [vmem:[#allocation8 + $0x8] sm:$0xff]
        %v692 = vld [vmem:[#allocation8 + $0x10] sm:$0xff]
        %v693 = vld [vmem:[#allocation8 + $0x18] sm:$0xff]
        %v694 = vld [vmem:[#allocation8 + $0x20] sm:$0xff]
        %v695 = vld [vmem:[#allocation8 + $0x28] sm:$0xff]
        %v696 = vld [vmem:[#allocation8 + $0x30] sm:$0xff]
        %v697 = vld [vmem:[#allocation8 + $0x38] sm:$0xff]
        %v698 = vld [vmem:[#allocation8 + $0x40] sm:$0xff]
        %v699 = vld [vmem:[#allocation8 + $0x48] sm:$0xff]
        %v700 = vld [vmem:[#allocation8 + $0x50] sm:$0xff]
        %v701 = vld [vmem:[#allocation8 + $0x58] sm:$0xff]
        %v702 = vld [vmem:[#allocation8 + $0x60] sm:$0xff]
        %v703 = vld [vmem:[#allocation8 + $0x68] sm:$0xff]
        %v704 = vld [vmem:[#allocation8 + $0x70] sm:$0xff]
        %v705 = vld [vmem:[#allocation8 + $0x78] sm:$0xff]
        %v706 = vld [vmem:[#allocation8 + $0x80] sm:$0xff]
        %v707 = vld [vmem:[#allocation8 + $0x88] sm:$0xff]
        %v708 = vld [vmem:[#allocation8 + $0x90] sm:$0xff]
        %v709 = vld [vmem:[#allocation8 + $0x98] sm:$0xff]
        %v710 = vld [vmem:[#allocation8 + $0xa0] sm:$0xff]
        %v711 = vld [vmem:[#allocation8 + $0xa8] sm:$0xff]
        %v712 = vld [vmem:[#allocation8 + $0xb0] sm:$0xff]
        %v713 = vld [vmem:[#allocation8 + $0xb8] sm:$0xff]
        %v714 = vld [vmem:[#allocation8 + $0xc0] sm:$0xff]
        %v715 = vld [vmem:[#allocation8 + $0xc8] sm:$0xff]
        %v716 = vld [vmem:[#allocation8 + $0xd0] sm:$0xff]
        %v717 = vld [vmem:[#allocation8 + $0xd8] sm:$0xff]
        %v718 = vld [vmem:[#allocation8 + $0xe0] sm:$0xff]
        %v719 = vld [vmem:[#allocation8 + $0xe8] sm:$0xff]
        %v720 = vld [vmem:[#allocation8 + $0xf0] sm:$0xff]
        %v721 = vld [vmem:[#allocation8 + $0xf8] sm:$0xff]
        %v722 = vld [vmem:[%s4] sm:$0x1]
        %v724 = vperm.slane %v722, 0
        %726 = vmatpush.msra.mxu0 %v705
        %727 = vmatpush.msra.mxu0 %v704
        %728 = vmatpush.msra.mxu0 %v703
        %729 = vmatpush.msra.mxu0 %v702
        %730 = vmatpush.msra.mxu0 %v701
        %731 = vmatpush.msra.mxu0 %v700
        %732 = vmatpush.msra.mxu0 %v699
        %733 = vmatpush.msra.mxu0 %v698
        %734 = vmatpush.msra.mxu0 %v697
        %735 = vmatpush.msra.mxu0 %v696
        %736 = vmatpush.msra.mxu0 %v695
        %737 = vmatpush.msra.mxu0 %v694
        %738 = vmatpush.msra.mxu0 %v693
        %739 = vmatpush.msra.mxu0 %v692
        %740 = vmatpush.msra.mxu0 %v691
        %741 = vmatpush.msra.mxu0 %v690
        %742 = vmatmul.f32.gmra.mxu0 %v658
        %v743 = vpop.f32.mrf.mxu0
        %v744 = vadd.f32 %v724, %v743
        %745 = vmatmul.f32.gmra.mxu0 %v660
        %v746 = vpop.f32.mrf.mxu0
        %v747 = vadd.f32 %v724, %v746
        %748 = vmatmul.f32.gmra.mxu0 %v662
        %v749 = vpop.f32.mrf.mxu0
        %v750 = vadd.f32 %v724, %v749
        %751 = vmatmul.f32.gmra.mxu0 %v664
        %v752 = vpop.f32.mrf.mxu0
        %v753 = vadd.f32 %v724, %v752
        %754 = vmatmul.f32.gmra.mxu0 %v666
        %v755 = vpop.f32.mrf.mxu0
        %v756 = vadd.f32 %v724, %v755
        %757 = vmatmul.f32.gmra.mxu0 %v668
        %v758 = vpop.f32.mrf.mxu0
        %v759 = vadd.f32 %v724, %v758
        %760 = vmatmul.f32.gmra.mxu0 %v670
        %v761 = vpop.f32.mrf.mxu0
        %v762 = vadd.f32 %v724, %v761
        %763 = vmatmul.f32.gmra.mxu0 %v672
        %v764 = vpop.f32.mrf.mxu0
        %v765 = vadd.f32 %v724, %v764
        %766 = vmatmul.f32.gmra.mxu0 %v674
        %v767 = vpop.f32.mrf.mxu0
        %v768 = vadd.f32 %v724, %v767
        %769 = vmatmul.f32.gmra.mxu0 %v676
        %v770 = vpop.f32.mrf.mxu0
        %v771 = vadd.f32 %v724, %v770
        %772 = vmatmul.f32.gmra.mxu0 %v678
        %v773 = vpop.f32.mrf.mxu0
        %v774 = vadd.f32 %v724, %v773
        %775 = vmatmul.f32.gmra.mxu0 %v680
        %v776 = vpop.f32.mrf.mxu0
        %v777 = vadd.f32 %v724, %v776
        %778 = vmatmul.f32.gmra.mxu0 %v682
        %v779 = vpop.f32.mrf.mxu0
        %v780 = vadd.f32 %v724, %v779
        %781 = vmatmul.f32.gmra.mxu0 %v684
        %v782 = vpop.f32.mrf.mxu0
        %v783 = vadd.f32 %v724, %v782
        %784 = vmatmul.f32.gmra.mxu0 %v686
        %v785 = vpop.f32.mrf.mxu0
        %v786 = vadd.f32 %v724, %v785
        %787 = vmatmul.f32.gmra.mxu0 %v688
        %v788 = vpop.f32.mrf.mxu0
        %v789 = vadd.f32 %v724, %v788
        %790 = vdwg.mxu0
        %791 = vmatpush.msra.mxu0 %v721
        %792 = vmatpush.msra.mxu0 %v720
        %793 = vmatpush.msra.mxu0 %v719
        %794 = vmatpush.msra.mxu0 %v718
        %795 = vmatpush.msra.mxu0 %v717
        %796 = vmatpush.msra.mxu0 %v716
        %797 = vmatpush.msra.mxu0 %v715
        %798 = vmatpush.msra.mxu0 %v714
        %799 = vmatpush.msra.mxu0 %v713
        %800 = vmatpush.msra.mxu0 %v712
        %801 = vmatpush.msra.mxu0 %v711
        %802 = vmatpush.msra.mxu0 %v710
        %803 = vmatpush.msra.mxu0 %v709
        %804 = vmatpush.msra.mxu0 %v708
        %805 = vmatpush.msra.mxu0 %v707
        %806 = vmatpush.msra.mxu0 %v706
        %807 = vmatmul.f32.gmra.mxu0 %v659
        %v808 = vpop.f32.mrf.mxu0
        %v809 = vadd.f32 %v744, %v808
        %810 = vmatmul.f32.gmra.mxu0 %v661
        %v811 = vpop.f32.mrf.mxu0
        %v812 = vadd.f32 %v747, %v811
        %813 = vmatmul.f32.gmra.mxu0 %v663
        %v814 = vpop.f32.mrf.mxu0
        %v815 = vadd.f32 %v750, %v814
        %816 = vmatmul.f32.gmra.mxu0 %v665
        %v817 = vpop.f32.mrf.mxu0
        %v818 = vadd.f32 %v753, %v817
        %819 = vmatmul.f32.gmra.mxu0 %v667
        %v820 = vpop.f32.mrf.mxu0
        %v821 = vadd.f32 %v756, %v820
        %822 = vmatmul.f32.gmra.mxu0 %v669
        %v823 = vpop.f32.mrf.mxu0
        %v824 = vadd.f32 %v759, %v823
        %825 = vmatmul.f32.gmra.mxu0 %v671
        %v826 = vpop.f32.mrf.mxu0
        %v827 = vadd.f32 %v762, %v826
        %828 = vmatmul.f32.gmra.mxu0 %v673
        %v829 = vpop.f32.mrf.mxu0
        %v830 = vadd.f32 %v765, %v829
        %831 = vmatmul.f32.gmra.mxu0 %v675
        %v832 = vpop.f32.mrf.mxu0
        %v833 = vadd.f32 %v768, %v832
        %834 = vmatmul.f32.gmra.mxu0 %v677
        %v835 = vpop.f32.mrf.mxu0
        %v836 = vadd.f32 %v771, %v835
        %837 = vmatmul.f32.gmra.mxu0 %v679
        %v838 = vpop.f32.mrf.mxu0
        %v839 = vadd.f32 %v774, %v838
        %840 = vmatmul.f32.gmra.mxu0 %v681
        %v841 = vpop.f32.mrf.mxu0
        %v842 = vadd.f32 %v777, %v841
        %843 = vmatmul.f32.gmra.mxu0 %v683
        %v844 = vpop.f32.mrf.mxu0
        %v845 = vadd.f32 %v780, %v844
        %846 = vmatmul.f32.gmra.mxu0 %v685
        %v847 = vpop.f32.mrf.mxu0
        %v848 = vadd.f32 %v783, %v847
        %849 = vmatmul.f32.gmra.mxu0 %v687
        %v850 = vpop.f32.mrf.mxu0
        %v851 = vadd.f32 %v786, %v850
        %852 = vmatmul.f32.gmra.mxu0 %v689
        %v853 = vpop.f32.mrf.mxu0
        %v854 = vadd.f32 %v789, %v853
        %855 = vdwg.mxu0
        %856 = vst [vmem:[%s293] sm:$0xff] %v809
        %857 = vst [vmem:[%s293 + $0x8] sm:$0xff] %v812
        %858 = vst [vmem:[%s293 + $0x10] sm:$0xff] %v815
        %859 = vst [vmem:[%s293 + $0x18] sm:$0xff] %v818
        %860 = vst [vmem:[%s293 + $0x20] sm:$0xff] %v821
        %861 = vst [vmem:[%s293 + $0x28] sm:$0xff] %v824
        %862 = vst [vmem:[%s293 + $0x30] sm:$0xff] %v827
        %863 = vst [vmem:[%s293 + $0x38] sm:$0xff] %v830
        %864 = vst [vmem:[%s293 + $0x40] sm:$0xff] %v833
        %865 = vst [vmem:[%s293 + $0x48] sm:$0xff] %v836
        %866 = vst [vmem:[%s293 + $0x50] sm:$0xff] %v839
        %867 = vst [vmem:[%s293 + $0x58] sm:$0xff] %v842
        %868 = vst [vmem:[%s293 + $0x60] sm:$0xff] %v845
        %869 = vst [vmem:[%s293 + $0x68] sm:$0xff] %v848
        %870 = vst [vmem:[%s293 + $0x70] sm:$0xff] %v851
        %871 = vst [vmem:[%s293 + $0x78] sm:$0xff] %v854
        %s872 = sand.u32 %s142, 1
        %s873 = scalar_lea.sflag [#allocation4], %s872
        %s874 = sand.u32 %s142, 1
        %s875 = smul.addr %s874, 128
        %s876 = scalar_lea.vmem [#allocation10], %s875
        // Predicated region
        $region57: #{tpu_custom_call.1} parent=39 // pred_check
          %p877 = pneg %p152
        $region58: #{tpu_custom_call.1} parent=39 // pred_check_branch
          %879 = sbr.rel (%p877) target = $region60
        $region59: #{tpu_custom_call.1} parent=39 // pred_region
          %s880 = smul.u32 16, %s24
          %882 = vsyncadd %s873, 0
          %s883 = smul.addr %s880, 8
          %s884 = scalar_lea.hbm %s5, %s883
          %s885 = sshll.u32 %s876, 4
          %s886 = int_to_ptr.vmem [resolvable:$true] %s885
          %s887 = sshll.u32 %s884, 4
          %s888 = int_to_ptr.hbm [resolvable:$true] %s887
          %893 = dma.vmem_to_hbm [thread:$0]  %s886, 2048, %s888, %s873, 128, 128, 8
        $region60: #{tpu_custom_call.1} parent=39 // pred_fallthru
          _
      $region40: #{tpu_custom_call.1} parent=5 // pred_fallthru
        _
      %p894 = scmp.le.s32.totalorder 2, %s19
      // Predicated region
      $region61: #{tpu_custom_call.1} parent=5 // pred_check
        %p895 = pneg %p894
      $region62: #{tpu_custom_call.1} parent=5 // pred_check_branch
        %897 = sbr.rel (%p895) target = $region64
      $region63: #{tpu_custom_call.1} parent=5 // pred_region
        %s898 = ssub.s32 %s19, 2
        // Predicated region
        $region65: #{tpu_custom_call.1} parent=63 // pred_check
          %p899 = pneg %p158
        $region66: #{tpu_custom_call.1} parent=63 // pred_check_branch
          %901 = sbr.rel (%p899) target = $region68
        $region67: #{tpu_custom_call.1} parent=63 // pred_region
          %s902 = sand.u32 %s143, 1
          %s903 = scalar_lea.sflag [#allocation4], %s902
          %s904 = sand.u32 %s143, 1
          %s905 = smul.addr %s904, 128
          %s906 = scalar_lea.vmem [#allocation10], %s905
          %908 = dma.done %s903, 2048
        $region68: #{tpu_custom_call.1} parent=63 // pred_fallthru
          _
      $region64: #{tpu_custom_call.1} parent=5 // pred_fallthru
        _
    $region6: #{tpu_custom_call.1} parent=1 // loop_footer
      %s23 = sadd.s32 1, %s19
    $region7: #{tpu_custom_call.1} parent=1 // loop_footer_branch
      %18 = sbr.rel target = $region3
    $region8: #{tpu_custom_call.1} parent=1 // loop_exit
      _
    %909 = vsyncpa [#allocation3], 1
    %s910 = scalar_lea.sflag [#allocation3], 1
    %911 = vsyncpa %s910, 1
    %912 = vsyncpa [#allocation6], 1
    %913 = vsyncpa [#allocation9], 1
    %914 = vsyncpa [#allocation4], 1
    %s915 = scalar_lea.sflag [#allocation4], 1
    %916 = vsyncpa %s915, 1

// kernel: tpu_custom_call.1
$region0: #{tpu_custom_call.1}
  #allocation0 [shape = 'u32[]', space=smem, size = 0x4, offset = 0x4, fixed_abs, tag = 'smem constant byte address 0x4 - core index']
  #allocation1 [shape = 'u32[72,128]{1,0:T(1,128)}', space=vmem, size = 0x9000, scoped, tag = 'internal scratch']
  %s0 = inlined_call_operand.hbm [shape: f32[512,256], index: 0, kind: input, shape index: {}]
  %s1 = inlined_call_operand.hbm [shape: f32[256,256], index: 1, kind: input, shape index: {}]
  %s2 = inlined_call_operand.hbm [shape: f32[1,256], index: 2, kind: input, shape index: {}]
  %s3 = inlined_call_operand.hbm [shape: f32[256,128], index: 3, kind: input, shape index: {}]
  %s4 = inlined_call_operand.vmem [shape: f32[1,128], index: 4, kind: input, shape index: {}]
  %s5 = inlined_call_operand.hbm [shape: f32[512,128], index: 5, kind: output, shape index: {}]
  %s6 = sld [smem:[#allocation0]]
  $region69: #{tpu_custom_call.1} parent=0
    _
  %s8 = ssub.s32 1, %s6
  %s9 = scalar_select 0, %s8, %s6
  $region1: #{tpu_custom_call.1} parent=0
    #allocation2 [shape = 'u8[262144]{0}', space=vmem, size = 0x40000, scoped, tag = 'input window, operand 0']
    #allocation3 [shape = 's32[2]{0}', space=sflag, size = 0x8, scoped, tag = 'scoped memory for tpu_custom_call.1']
    #allocation4 [shape = 's32[2]{0}', space=sflag, size = 0x8, scoped, tag = 'scoped memory for tpu_custom_call.1']
    #allocation5 [shape = 'u8[262144]{0}', space=vmem, size = 0x40000, scoped, tag = 'input window, operand 1, single buffered']
    #allocation6 [shape = 's32[1]{0}', space=sflag, size = 0x4, scoped, tag = 'scoped memory for tpu_custom_call.1']
    #allocation7 [shape = 'u8[1024]{0}', space=vmem, size = 0x400, scoped, tag = 'input window, operand 2, single buffered']
    #allocation8 [shape = 'u8[131072]{0}', space=vmem, size = 0x20000, scoped, tag = 'input window, operand 3, single buffered']
    #allocation9 [shape = 's32[1]{0}', space=sflag, size = 0x4, scoped, tag = 'scoped memory for tpu_custom_call.1']
    #allocation10 [shape = 'u8[131072]{0}', space=vmem, size = 0x20000, scoped, tag = 'output window, operand 0']
    %10 = vsyncpa [#allocation3], 0
    %s11 = scalar_lea.sflag [#allocation3], 1
    %12 = vsyncpa %s11, 0
    %13 = vsyncpa [#allocation6], 0
    %14 = vsyncpa [#allocation9], 0
    %15 = vsyncpa [#allocation4], 0
    %s16 = scalar_lea.sflag [#allocation4], 1
    %17 = vsyncpa %s16, 0
    loop: start=0, step=1, limit=6
    $region2: #{tpu_custom_call.1} parent=1 // loop_pre_header
      _
    $region3: #{tpu_custom_call.1} parent=1 // loop_header
      %s19 = sphi 0, %s23
      %p20 = scmp.ge.s32.totalorder %s19, 6
      %s29 = sphi 0, %s31
      %s32 = sphi 0, %s29
      %s33 = sphi 0, %s32
      %s49 = sphi 0, %s33
      %s53 = sphi 0, %s53
      %s55 = sphi 0, %s53
      %s56 = sphi 0, %s55
      %s70 = sphi 0, %s56
      %s74 = sphi 0, %s74
      %s76 = sphi 0, %s74
      %s77 = sphi 0, %s76
      %s91 = sphi 0, %s77
      %s95 = sphi 0, %s95
      %s97 = sphi 0, %s95
      %s98 = sphi 0, %s97
      %s112 = sphi 0, %s98
      %s116 = sphi 0, %s116
      %s118 = sphi 0, %s116
      %s119 = sphi 0, %s118
      %s133 = sphi 0, %s119
      %s139 = sphi 0, %s141
      %s142 = sphi 0, %s139
      %s143 = sphi 0, %s142
      %s159 = sphi 0, %s143
    $region4: #{tpu_custom_call.1} parent=1 // loop_header_branch
      %22 = sbr.rel (%p20) target = $region8
    $region5: #{tpu_custom_call.1} parent=1 // loop_body
      %s24 = ssub.s32 %s19, 1
      %s25 = ssub.s32 %s19, 2
      %s26 = sadd.s32 %s19, 1
      %s27 = ssub.s32 %s19, %s26
      %p28 = scmp.eq.s32.totalorder %s27, 0
      %s30 = sadd.s32 %s29, 1
      %s31 = scalar_select %p28, %s29, %s30
      %p34 = pneg %p28
      %p35 = scmp.eq.s32.totalorder %s19, 3
      %p36 = por %p34, %p35
      %p37 = scmp.ne.s32.totalorder %s29, %s32
      %p38 = scmp.eq.s32.totalorder %s19, 0
      %p39 = por %p37, %p38
      %p40 = scmp.ne.s32.totalorder %s29, %s32
      %p41 = scmp.eq.s32.totalorder %s24, 3
      %p42 = por %p40, %p41
      %p43 = scmp.ne.s32.totalorder %s32, %s33
      %p44 = scmp.eq.s32.totalorder %s24, 0
      %p45 = por %p43, %p44
      %p46 = scmp.ne.s32.totalorder %s32, %s33
      %p47 = scmp.eq.s32.totalorder %s25, 3
      %p48 = por %p46, %p47
      %p50 = scmp.ne.s32.totalorder %s33, %s49
      %p51 = scmp.eq.s32.totalorder %s25, 0
      %p52 = por %p50, %p51
      %s54 = sadd.s32 %s53, 1
      %p57 = scmp.eq.s32.totalorder %s19, 3
      %p58 = scmp.ne.s32.totalorder %s53, %s55
      %p59 = scmp.eq.s32.totalorder %s19, 0
      %p60 = por %p58, %p59
      %p61 = scmp.ne.s32.totalorder %s53, %s55
      %p62 = scmp.eq.s32.totalorder %s24, 3
      %p63 = por %p61, %p62
      %p64 = scmp.ne.s32.totalorder %s55, %s56
      %p65 = scmp.eq.s32.totalorder %s24, 0
      %p66 = por %p64, %p65
      %p67 = scmp.ne.s32.totalorder %s55, %s56
      %p68 = scmp.eq.s32.totalorder %s25, 3
      %p69 = por %p67, %p68
      %p71 = scmp.ne.s32.totalorder %s56, %s70
      %p72 = scmp.eq.s32.totalorder %s25, 0
      %p73 = por %p71, %p72
      %s75 = sadd.s32 %s74, 1
      %p78 = scmp.eq.s32.totalorder %s19, 3
      %p79 = scmp.ne.s32.totalorder %s74, %s76
      %p80 = scmp.eq.s32.totalorder %s19, 0
      %p81 = por %p79, %p80
      %p82 = scmp.ne.s32.totalorder %s74, %s76
      %p83 = scmp.eq.s32.totalorder %s24, 3
      %p84 = por %p82, %p83
      %p85 = scmp.ne.s32.totalorder %s76, %s77
      %p86 = scmp.eq.s32.totalorder %s24, 0
      %p87 = por %p85, %p86
      %p88 = scmp.ne.s32.totalorder %s76, %s77
      %p89 = scmp.eq.s32.totalorder %s25, 3
      %p90 = por %p88, %p89
      %p92 = scmp.ne.s32.totalorder %s77, %s91
      %p93 = scmp.eq.s32.totalorder %s25, 0
      %p94 = por %p92, %p93
      %s96 = sadd.s32 %s95, 1
      %p99 = scmp.eq.s32.totalorder %s19, 3
      %p100 = scmp.ne.s32.totalorder %s95, %s97
      %p101 = scmp.eq.s32.totalorder %s19, 0
      %p102 = por %p100, %p101
      %p103 = scmp.ne.s32.totalorder %s95, %s97
      %p104 = scmp.eq.s32.totalorder %s24, 3
      %p105 = por %p103, %p104
      %p106 = scmp.ne.s32.totalorder %s97, %s98
      %p107 = scmp.eq.s32.totalorder %s24, 0
      %p108 = por %p106, %p107
      %p109 = scmp.ne.s32.totalorder %s97, %s98
      %p110 = scmp.eq.s32.totalorder %s25, 3
      %p111 = por %p109, %p110
      %p113 = scmp.ne.s32.totalorder %s98, %s112
      %p114 = scmp.eq.s32.totalorder %s25, 0
      %p115 = por %p113, %p114
      %s117 = sadd.s32 %s116, 1
      %p120 = scmp.eq.s32.totalorder %s19, 3
      %p121 = scmp.ne.s32.totalorder %s116, %s118
      %p122 = scmp.eq.s32.totalorder %s19, 0
      %p123 = por %p121, %p122
      %p124 = scmp.ne.s32.totalorder %s116, %s118
      %p125 = scmp.eq.s32.totalorder %s24, 3
      %p126 = por %p124, %p125
      %p127 = scmp.ne.s32.totalorder %s118, %s119
      %p128 = scmp.eq.s32.totalorder %s24, 0
      %p129 = por %p127, %p128
      %p130 = scmp.ne.s32.totalorder %s118, %s119
      %p131 = scmp.eq.s32.totalorder %s25, 3
      %p132 = por %p130, %p131
      %p134 = scmp.ne.s32.totalorder %s119, %s133
      %p135 = scmp.eq.s32.totalorder %s25, 0
      %p136 = por %p134, %p135
      %s137 = ssub.s32 %s19, %s26
      %p138 = scmp.eq.s32.totalorder %s137, 0
      %s140 = sadd.s32 %s139, 1
      %s141 = scalar_select %p138, %s139, %s140
      %p144 = pneg %p138
      %p145 = scmp.eq.s32.totalorder %s19, 3
      %p146 = por %p144, %p145
      %p147 = scmp.ne.s32.totalorder %s139, %s142
      %p148 = scmp.eq.s32.totalorder %s19, 0
      %p149 = por %p147, %p148
      %p150 = scmp.ne.s32.totalorder %s139, %s142
      %p151 = scmp.eq.s32.totalorder %s24, 3
      %p152 = por %p150, %p151
      %p153 = scmp.ne.s32.totalorder %s142, %s143
      %p154 = scmp.eq.s32.totalorder %s24, 0
      %p155 = por %p153, %p154
      %p156 = scmp.ne.s32.totalorder %s142, %s143
      %p157 = scmp.eq.s32.totalorder %s25, 3
      %p158 = por %p156, %p157
      %p160 = scmp.ne.s32.totalorder %s143, %s159
      %p161 = scmp.eq.s32.totalorder %s25, 0
      %p162 = por %p160, %p161
      %p163 = scmp.le.s32.totalorder 1, %s19
      %p164 = scmp.lt.s32.totalorder %s19, 5
      %p165 = pnand %p163, %p164
      %p166 = pneg %p165
      // Predicated region
      $region9: #{tpu_custom_call.1} parent=5 // pred_check
        _
      $region10: #{tpu_custom_call.1} parent=5 // pred_check_branch
        %168 = sbr.rel (%p165) target = $region12
      $region11: #{tpu_custom_call.1} parent=5 // pred_region
        %s169 = ssub.s32 %s19, 1
        // Predicated region
        $region13: #{tpu_custom_call.1} parent=11 // pred_check
          %p170 = pneg %p66
        $region14: #{tpu_custom_call.1} parent=11 // pred_check_branch
          %172 = sbr.rel (%p170) target = $region16
        $region15: #{tpu_custom_call.1} parent=11 // pred_region
          %174 = vsyncadd [#allocation6], 0
          %s175 = sshll.u32 %s1, 4
          %s176 = int_to_ptr.hbm [resolvable:$true] %s175
          %s177 = sshll.u32 [#allocation5], 4
          %s178 = int_to_ptr.vmem [resolvable:$true] %s177
          %183 = dma.hbm_to_vmem [thread:$0]  %s176, 8192, %s178, [#allocation6], 256, 256, 16
        $region16: #{tpu_custom_call.1} parent=11 // pred_fallthru
          _
        // Predicated region
        $region17: #{tpu_custom_call.1} parent=11 // pred_check
          %p184 = pneg %p87
        $region18: #{tpu_custom_call.1} parent=11 // pred_check_branch
          %186 = sbr.rel (%p184) target = $region20
        $region19: #{tpu_custom_call.1} parent=11 // pred_region
          %188 = vsyncadd [#allocation6], 0
          %s190 = sshll.u32 %s2, 4
          %s191 = int_to_ptr.hbm [resolvable:$true] %s190
          %s192 = sshll.u32 [#allocation7], 4
          %s193 = int_to_ptr.vmem [resolvable:$true] %s192
          %195 = dma.hbm_to_vmem [thread:$0]  %s191, 32, %s193, [#allocation6]
        $region20: #{tpu_custom_call.1} parent=11 // pred_fallthru
          _
        // Predicated region
        $region21: #{tpu_custom_call.1} parent=11 // pred_check
          %p196 = pneg %p108
        $region22: #{tpu_custom_call.1} parent=11 // pred_check_branch
          %198 = sbr.rel (%p196) target = $region24
        $region23: #{tpu_custom_call.1} parent=11 // pred_region
          %200 = vsyncadd [#allocation9], 0
          %s201 = sshll.u32 %s3, 4
          %s202 = int_to_ptr.hbm [resolvable:$true] %s201
          %s203 = sshll.u32 [#allocation8], 4
          %s204 = int_to_ptr.vmem [resolvable:$true] %s203
          %209 = dma.hbm_to_vmem [thread:$0]  %s202, 4096, %s204, [#allocation9], 128, 128, 8
        $region24: #{tpu_custom_call.1} parent=11 // pred_fallthru
          _
        // Predicated region
        $region25: #{tpu_custom_call.1} parent=11 // pred_check
          %p210 = pneg %p129
        $region26: #{tpu_custom_call.1} parent=11 // pred_check_branch
          %212 = sbr.rel (%p210) target = $region28
        $region27: #{tpu_custom_call.1} parent=11 // pred_region
          _
        $region28: #{tpu_custom_call.1} parent=11 // pred_fallthru
          _
      $region12: #{tpu_custom_call.1} parent=5 // pred_fallthru
        _
      %p213 = scmp.lt.s32.totalorder %s19, 4
      // Predicated region
      $region29: #{tpu_custom_call.1} parent=5 // pred_check
        %p214 = pneg %p213
      $region30: #{tpu_custom_call.1} parent=5 // pred_check_branch
        %216 = sbr.rel (%p214) target = $region32
      $region31: #{tpu_custom_call.1} parent=5 // pred_region
        // Predicated region
        $region33: #{tpu_custom_call.1} parent=31 // pred_check
          %p217 = pneg %p39
        $region34: #{tpu_custom_call.1} parent=31 // pred_check_branch
          %219 = sbr.rel (%p217) target = $region36
        $region35: #{tpu_custom_call.1} parent=31 // pred_region
          %s220 = sand.u32 %s29, 1
          %s221 = scalar_lea.sflag [#allocation3], %s220
          %s222 = sand.u32 %s29, 1
          %s223 = smul.addr %s222, 256
          %s224 = scalar_lea.vmem [#allocation2], %s223
          %s225 = smul.u32 16, %s19
          %227 = vsyncadd %s221, 0
          %s228 = smul.addr %s225, 2
          %s229 = smul.addr %s228, 8
          %s230 = scalar_lea.hbm %s0, %s229
          %s231 = sshll.u32 %s230, 4
          %s232 = int_to_ptr.hbm [resolvable:$true] %s231
          %s233 = sshll.u32 %s224, 4
          %s234 = int_to_ptr.vmem [resolvable:$true] %s233
          %239 = dma.hbm_to_vmem [thread:$0]  %s232, 4096, %s234, %s221, 256, 256, 16
        $region36: #{tpu_custom_call.1} parent=31 // pred_fallthru
          _
      $region32: #{tpu_custom_call.1} parent=5 // pred_fallthru
        _
      %p240 = scmp.le.s32.totalorder 1, %s19
      %p241 = scmp.lt.s32.totalorder %s19, 5
      %p242 = pnand %p240, %p241
      %p243 = pneg %p242
      // Predicated region
      $region37: #{tpu_custom_call.1} parent=5 // pred_check
        _
      $region38: #{tpu_custom_call.1} parent=5 // pred_check_branch
        %245 = sbr.rel (%p242) target = $region40
      $region39: #{tpu_custom_call.1} parent=5 // pred_region
        %s246 = ssub.s32 %s19, 1
        %s247 = sand.u32 %s32, 1
        %s248 = scalar_lea.sflag [#allocation3], %s247
        %s249 = sand.u32 %s32, 1
        %s250 = smul.addr %s249, 256
        %s251 = scalar_lea.vmem [#allocation2], %s250
        // Predicated region
        $region41: #{tpu_custom_call.1} parent=39 // pred_check
          %p252 = pneg %p45
        $region42: #{tpu_custom_call.1} parent=39 // pred_check_branch
          %254 = sbr.rel (%p252) target = $region44
        $region43: #{tpu_custom_call.1} parent=39 // pred_region
          %256 = dma.done %s248, 4096
        $region44: #{tpu_custom_call.1} parent=39 // pred_fallthru
          _
        // Predicated region
        $region45: #{tpu_custom_call.1} parent=39 // pred_check
          %p257 = pneg %p66
        $region46: #{tpu_custom_call.1} parent=39 // pred_check_branch
          %259 = sbr.rel (%p257) target = $region48
        $region47: #{tpu_custom_call.1} parent=39 // pred_region
          %261 = dma.done [#allocation6], 8192
        $region48: #{tpu_custom_call.1} parent=39 // pred_fallthru
          _
        // Predicated region
        $region49: #{tpu_custom_call.1} parent=39 // pred_check
          %p262 = pneg %p87
        $region50: #{tpu_custom_call.1} parent=39 // pred_check_branch
          %264 = sbr.rel (%p262) target = $region52
        $region51: #{tpu_custom_call.1} parent=39 // pred_region
          %266 = dma.done [#allocation6], 32
        $region52: #{tpu_custom_call.1} parent=39 // pred_fallthru
          _
        // Predicated region
        $region53: #{tpu_custom_call.1} parent=39 // pred_check
          %p267 = pneg %p108
        $region54: #{tpu_custom_call.1} parent=39 // pred_check_branch
          %269 = sbr.rel (%p267) target = $region56
        $region55: #{tpu_custom_call.1} parent=39 // pred_region
          %271 = dma.done [#allocation9], 4096
        $region56: #{tpu_custom_call.1} parent=39 // pred_fallthru
          _
        %s272 = sand.u32 %s32, 1
        %s273 = scalar_lea.sflag [#allocation3], %s272
        %s274 = sand.u32 %s32, 1
        %s275 = smul.addr %s274, 256
        %s276 = scalar_lea.vmem [#allocation2], %s275
        %p277 = pneg %p45
        %p278 = pneg %p42
        %p279 = pneg %p66
        %p280 = pneg %p63
        %p281 = pneg %p87
        %p282 = pneg %p84
        %p283 = pneg %p108
        %p284 = pneg %p105
        %p285 = pneg %p129
        %p286 = pneg %p126
        %p287 = pneg %p155
        %p288 = pneg %p152
        %s289 = sand.u32 %s142, 1
        %s290 = scalar_lea.sflag [#allocation4], %s289
        %s291 = sand.u32 %s142, 1
        %s292 = smul.addr %s291, 128
        %s293 = scalar_lea.vmem [#allocation10], %s292
        %s294 = smul.u32 16, %s24
        %s295 = smul.u32 16, %s24
        %v296 = vld [vmem:[%s251] sm:$0xff]
        %v297 = vld [vmem:[%s251 + $0x8] sm:$0xff]
        %v298 = vld [vmem:[%s251 + $0x10] sm:$0xff]
        %v299 = vld [vmem:[%s251 + $0x18] sm:$0xff]
        %v300 = vld [vmem:[%s251 + $0x20] sm:$0xff]
        %v301 = vld [vmem:[%s251 + $0x28] sm:$0xff]
        %v302 = vld [vmem:[%s251 + $0x30] sm:$0xff]
        %v303 = vld [vmem:[%s251 + $0x38] sm:$0xff]
        %v304 = vld [vmem:[%s251 + $0x40] sm:$0xff]
        %v305 = vld [vmem:[%s251 + $0x48] sm:$0xff]
        %v306 = vld [vmem:[%s251 + $0x50] sm:$0xff]
        %v307 = vld [vmem:[%s251 + $0x58] sm:$0xff]
        %v308 = vld [vmem:[%s251 + $0x60] sm:$0xff]
        %v309 = vld [vmem:[%s251 + $0x68] sm:$0xff]
        %v310 = vld [vmem:[%s251 + $0x70] sm:$0xff]
        %v311 = vld [vmem:[%s251 + $0x78] sm:$0xff]
        %v312 = vld [vmem:[%s251 + $0x80] sm:$0xff]
        %v313 = vld [vmem:[%s251 + $0x88] sm:$0xff]
        %v314 = vld [vmem:[%s251 + $0x90] sm:$0xff]
        %v315 = vld [vmem:[%s251 + $0x98] sm:$0xff]
        %v316 = vld [vmem:[%s251 + $0xa0] sm:$0xff]
        %v317 = vld [vmem:[%s251 + $0xa8] sm:$0xff]
        %v318 = vld [vmem:[%s251 + $0xb0] sm:$0xff]
        %v319 = vld [vmem:[%s251 + $0xb8] sm:$0xff]
        %v320 = vld [vmem:[%s251 + $0xc0] sm:$0xff]
        %v321 = vld [vmem:[%s251 + $0xc8] sm:$0xff]
        %v322 = vld [vmem:[%s251 + $0xd0] sm:$0xff]
        %v323 = vld [vmem:[%s251 + $0xd8] sm:$0xff]
        %v324 = vld [vmem:[%s251 + $0xe0] sm:$0xff]
        %v325 = vld [vmem:[%s251 + $0xe8] sm:$0xff]
        %v326 = vld [vmem:[%s251 + $0xf0] sm:$0xff]
        %v327 = vld [vmem:[%s251 + $0xf8] sm:$0xff]
        %v328 = vld [vmem:[#allocation5] sm:$0xff]
        %v329 = vld [vmem:[#allocation5 + $0x8] sm:$0xff]
        %v330 = vld [vmem:[#allocation5 + $0x10] sm:$0xff]
        %v331 = vld [vmem:[#allocation5 + $0x18] sm:$0xff]
        %v332 = vld [vmem:[#allocation5 + $0x20] sm:$0xff]
        %v333 = vld [vmem:[#allocation5 + $0x28] sm:$0xff]
        %v334 = vld [vmem:[#allocation5 + $0x30] sm:$0xff]
        %v335 = vld [vmem:[#allocation5 + $0x38] sm:$0xff]
        %v336 = vld [vmem:[#allocation5 + $0x40] sm:$0xff]
        %v337 = vld [vmem:[#allocation5 + $0x48] sm:$0xff]
        %v338 = vld [vmem:[#allocation5 + $0x50] sm:$0xff]
        %v339 = vld [vmem:[#allocation5 + $0x58] sm:$0xff]
        %v340 = vld [vmem:[#allocation5 + $0x60] sm:$0xff]
        %v341 = vld [vmem:[#allocation5 + $0x68] sm:$0xff]
        %v342 = vld [vmem:[#allocation5 + $0x70] sm:$0xff]
        %v343 = vld [vmem:[#allocation5 + $0x78] sm:$0xff]
        %v344 = vld [vmem:[#allocation5 + $0x80] sm:$0xff]
        %v345 = vld [vmem:[#allocation5 + $0x88] sm:$0xff]
        %v346 = vld [vmem:[#allocation5 + $0x90] sm:$0xff]
        %v347 = vld [vmem:[#allocation5 + $0x98] sm:$0xff]
        %v348 = vld [vmem:[#allocation5 + $0xa0] sm:$0xff]
        %v349 = vld [vmem:[#allocation5 + $0xa8] sm:$0xff]
        %v350 = vld [vmem:[#allocation5 + $0xb0] sm:$0xff]
        %v351 = vld [vmem:[#allocation5 + $0xb8] sm:$0xff]
        %v352 = vld [vmem:[#allocation5 + $0xc0] sm:$0xff]
        %v353 = vld [vmem:[#allocation5 + $0xc8] sm:$0xff]
        %v354 = vld [vmem:[#allocation5 + $0xd0] sm:$0xff]
        %v355 = vld [vmem:[#allocation5 + $0xd8] sm:$0xff]
        %v356 = vld [vmem:[#allocation5 + $0xe0] sm:$0xff]
        %v357 = vld [vmem:[#allocation5 + $0xe8] sm:$0xff]
        %v358 = vld [vmem:[#allocation5 + $0xf0] sm:$0xff]
        %v359 = vld [vmem:[#allocation5 + $0xf8] sm:$0xff]
        %v360 = vld [vmem:[#allocation5 + $0x100] sm:$0xff]
        %v361 = vld [vmem:[#allocation5 + $0x108] sm:$0xff]
        %v362 = vld [vmem:[#allocation5 + $0x110] sm:$0xff]
        %v363 = vld [vmem:[#allocation5 + $0x118] sm:$0xff]
        %v364 = vld [vmem:[#allocation5 + $0x120] sm:$0xff]
        %v365 = vld [vmem:[#allocation5 + $0x128] sm:$0xff]
        %v366 = vld [vmem:[#allocation5 + $0x130] sm:$0xff]
        %v367 = vld [vmem:[#allocation5 + $0x138] sm:$0xff]
        %v368 = vld [vmem:[#allocation5 + $0x140] sm:$0xff]
        %v369 = vld [vmem:[#allocation5 + $0x148] sm:$0xff]
        %v370 = vld [vmem:[#allocation5 + $0x150] sm:$0xff]
        %v371 = vld [vmem:[#allocation5 + $0x158] sm:$0xff]
        %v372 = vld [vmem:[#allocation5 + $0x160] sm:$0xff]
        %v373 = vld [vmem:[#allocation5 + $0x168] sm:$0xff]
        %v374 = vld [vmem:[#allocation5 + $0x170] sm:$0xff]
        %v375 = vld [vmem:[#allocation5 + $0x178] sm:$0xff]
        %v376 = vld [vmem:[#allocation5 + $0x180] sm:$0xff]
        %v377 = vld [vmem:[#allocation5 + $0x188] sm:$0xff]
        %v378 = vld [vmem:[#allocation5 + $0x190] sm:$0xff]
        %v379 = vld [vmem:[#allocation5 + $0x198] sm:$0xff]
        %v380 = vld [vmem:[#allocation5 + $0x1a0] sm:$0xff]
        %v381 = vld [vmem:[#allocation5 + $0x1a8] sm:$0xff]
        %v382 = vld [vmem:[#allocation5 + $0x1b0] sm:$0xff]
        %v383 = vld [vmem:[#allocation5 + $0x1b8] sm:$0xff]
        %v384 = vld [vmem:[#allocation5 + $0x1c0] sm:$0xff]
        %v385 = vld [vmem:[#allocation5 + $0x1c8] sm:$0xff]
        %v386 = vld [vmem:[#allocation5 + $0x1d0] sm:$0xff]
        %v387 = vld [vmem:[#allocation5 + $0x1d8] sm:$0xff]
        %v388 = vld [vmem:[#allocation5 + $0x1e0] sm:$0xff]
        %v389 = vld [vmem:[#allocation5 + $0x1e8] sm:$0xff]
        %v390 = vld [vmem:[#allocation5 + $0x1f0] sm:$0xff]
        %v391 = vld [vmem:[#allocation5 + $0x1f8] sm:$0xff]
        %v392 = vld [vmem:[#allocation7] sm:$0x3]
        %v394 = vperm.slane %v392, 0
        %v395 = vperm.slane %v392, 1
        %398 = vmatpush.msra.mxu0 %v358
        %399 = vmatpush.msra.mxu0 %v356
        %400 = vmatpush.msra.mxu0 %v354
        %401 = vmatpush.msra.mxu0 %v352
        %402 = vmatpush.msra.mxu0 %v350
        %403 = vmatpush.msra.mxu0 %v348
        %404 = vmatpush.msra.mxu0 %v346
        %405 = vmatpush.msra.mxu0 %v344
        %406 = vmatpush.msra.mxu0 %v342
        %407 = vmatpush.msra.mxu0 %v340
        %408 = vmatpush.msra.mxu0 %v338
        %409 = vmatpush.msra.mxu0 %v336
        %410 = vmatpush.msra.mxu0 %v334
        %411 = vmatpush.msra.mxu0 %v332
        %412 = vmatpush.msra.mxu0 %v330
        %413 = vmatpush.msra.mxu0 %v328
        %414 = vmatmul.f32.gmra.mxu0 %v296
        %v415 = vpop.f32.mrf.mxu0
        %v416 = vadd.f32 %v394, %v415
        %417 = vmatmul.f32.gmra.mxu0 %v298
        %v418 = vpop.f32.mrf.mxu0
        %v419 = vadd.f32 %v394, %v418
        %420 = vmatmul.f32.gmra.mxu0 %v300
        %v421 = vpop.f32.mrf.mxu0
        %v422 = vadd.f32 %v394, %v421
        %423 = vmatmul.f32.gmra.mxu0 %v302
        %v424 = vpop.f32.mrf.mxu0
        %v425 = vadd.f32 %v394, %v424
        %426 = vmatmul.f32.gmra.mxu0 %v304
        %v427 = vpop.f32.mrf.mxu0
        %v428 = vadd.f32 %v394, %v427
        %429 = vmatmul.f32.gmra.mxu0 %v306
        %v430 = vpop.f32.mrf.mxu0
        %v431 = vadd.f32 %v394, %v430
        %432 = vmatmul.f32.gmra.mxu0 %v308
        %v433 = vpop.f32.mrf.mxu0
        %v434 = vadd.f32 %v394, %v433
        %435 = vmatmul.f32.gmra.mxu0 %v310
        %v436 = vpop.f32.mrf.mxu0
        %v437 = vadd.f32 %v394, %v436
        %438 = vmatmul.f32.gmra.mxu0 %v312
        %v439 = vpop.f32.mrf.mxu0
        %v440 = vadd.f32 %v394, %v439
        %441 = vmatmul.f32.gmra.mxu0 %v314
        %v442 = vpop.f32.mrf.mxu0
        %v443 = vadd.f32 %v394, %v442
        %444 = vmatmul.f32.gmra.mxu0 %v316
        %v445 = vpop.f32.mrf.mxu0
        %v446 = vadd.f32 %v394, %v445
        %447 = vmatmul.f32.gmra.mxu0 %v318
        %v448 = vpop.f32.mrf.mxu0
        %v449 = vadd.f32 %v394, %v448
        %450 = vmatmul.f32.gmra.mxu0 %v320
        %v451 = vpop.f32.mrf.mxu0
        %v452 = vadd.f32 %v394, %v451
        %453 = vmatmul.f32.gmra.mxu0 %v322
        %v454 = vpop.f32.mrf.mxu0
        %v455 = vadd.f32 %v394, %v454
        %456 = vmatmul.f32.gmra.mxu0 %v324
        %v457 = vpop.f32.mrf.mxu0
        %v458 = vadd.f32 %v394, %v457
        %459 = vmatmul.f32.gmra.mxu0 %v326
        %v460 = vpop.f32.mrf.mxu0
        %v461 = vadd.f32 %v394, %v460
        %462 = vdwg.mxu0
        %463 = vmatpush.msra.mxu0 %v390
        %464 = vmatpush.msra.mxu0 %v388
        %465 = vmatpush.msra.mxu0 %v386
        %466 = vmatpush.msra.mxu0 %v384
        %467 = vmatpush.msra.mxu0 %v382
        %468 = vmatpush.msra.mxu0 %v380
        %469 = vmatpush.msra.mxu0 %v378
        %470 = vmatpush.msra.mxu0 %v376
        %471 = vmatpush.msra.mxu0 %v374
        %472 = vmatpush.msra.mxu0 %v372
        %473 = vmatpush.msra.mxu0 %v370
        %474 = vmatpush.msra.mxu0 %v368
        %475 = vmatpush.msra.mxu0 %v366
        %476 = vmatpush.msra.mxu0 %v364
        %477 = vmatpush.msra.mxu0 %v362
        %478 = vmatpush.msra.mxu0 %v360
        %479 = vmatmul.f32.gmra.mxu0 %v297
        %v480 = vpop.f32.mrf.mxu0
        %v481 = vadd.f32 %v416, %v480
        %482 = vmatmul.f32.gmra.mxu0 %v299
        %v483 = vpop.f32.mrf.mxu0
        %v484 = vadd.f32 %v419, %v483
        %485 = vmatmul.f32.gmra.mxu0 %v301
        %v486 = vpop.f32.mrf.mxu0
        %v487 = vadd.f32 %v422, %v486
        %488 = vmatmul.f32.gmra.mxu0 %v303
        %v489 = vpop.f32.mrf.mxu0
        %v490 = vadd.f32 %v425, %v489
        %491 = vmatmul.f32.gmra.mxu0 %v305
        %v492 = vpop.f32.mrf.mxu0
        %v493 = vadd.f32 %v428, %v492
        %494 = vmatmul.f32.gmra.mxu0 %v307
        %v495 = vpop.f32.mrf.mxu0
        %v496 = vadd.f32 %v431, %v495
        %497 = vmatmul.f32.gmra.mxu0 %v309
        %v498 = vpop.f32.mrf.mxu0
        %v499 = vadd.f32 %v434, %v498
        %500 = vmatmul.f32.gmra.mxu0 %v311
        %v501 = vpop.f32.mrf.mxu0
        %v502 = vadd.f32 %v437, %v501
        %503 = vmatmul.f32.gmra.mxu0 %v313
        %v504 = vpop.f32.mrf.mxu0
        %v505 = vadd.f32 %v440, %v504
        %506 = vmatmul.f32.gmra.mxu0 %v315
        %v507 = vpop.f32.mrf.mxu0
        %v508 = vadd.f32 %v443, %v507
        %509 = vmatmul.f32.gmra.mxu0 %v317
        %v510 = vpop.f32.mrf.mxu0
        %v511 = vadd.f32 %v446, %v510
        %512 = vmatmul.f32.gmra.mxu0 %v319
        %v513 = vpop.f32.mrf.mxu0
        %v514 = vadd.f32 %v449, %v513
        %515 = vmatmul.f32.gmra.mxu0 %v321
        %v516 = vpop.f32.mrf.mxu0
        %v517 = vadd.f32 %v452, %v516
        %518 = vmatmul.f32.gmra.mxu0 %v323
        %v519 = vpop.f32.mrf.mxu0
        %v520 = vadd.f32 %v455, %v519
        %521 = vmatmul.f32.gmra.mxu0 %v325
        %v522 = vpop.f32.mrf.mxu0
        %v523 = vadd.f32 %v458, %v522
        %524 = vmatmul.f32.gmra.mxu0 %v327
        %v525 = vpop.f32.mrf.mxu0
        %v526 = vadd.f32 %v461, %v525
        %527 = vdwg.mxu0
        %528 = vmatpush.msra.mxu0 %v359
        %529 = vmatpush.msra.mxu0 %v357
        %530 = vmatpush.msra.mxu0 %v355
        %531 = vmatpush.msra.mxu0 %v353
        %532 = vmatpush.msra.mxu0 %v351
        %533 = vmatpush.msra.mxu0 %v349
        %534 = vmatpush.msra.mxu0 %v347
        %535 = vmatpush.msra.mxu0 %v345
        %536 = vmatpush.msra.mxu0 %v343
        %537 = vmatpush.msra.mxu0 %v341
        %538 = vmatpush.msra.mxu0 %v339
        %539 = vmatpush.msra.mxu0 %v337
        %540 = vmatpush.msra.mxu0 %v335
        %541 = vmatpush.msra.mxu0 %v333
        %542 = vmatpush.msra.mxu0 %v331
        %543 = vmatpush.msra.mxu0 %v329
        %544 = vmatmul.f32.gmra.mxu0 %v296
        %v545 = vpop.f32.mrf.mxu0
        %v546 = vadd.f32 %v395, %v545
        %547 = vmatmul.f32.gmra.mxu0 %v298
        %v548 = vpop.f32.mrf.mxu0
        %v549 = vadd.f32 %v395, %v548
        %550 = vmatmul.f32.gmra.mxu0 %v300
        %v551 = vpop.f32.mrf.mxu0
        %v552 = vadd.f32 %v395, %v551
        %553 = vmatmul.f32.gmra.mxu0 %v302
        %v554 = vpop.f32.mrf.mxu0
        %v555 = vadd.f32 %v395, %v554
        %556 = vmatmul.f32.gmra.mxu0 %v304
        %v557 = vpop.f32.mrf.mxu0
        %v558 = vadd.f32 %v395, %v557
        %559 = vmatmul.f32.gmra.mxu0 %v306
        %v560 = vpop.f32.mrf.mxu0
        %v561 = vadd.f32 %v395, %v560
        %562 = vmatmul.f32.gmra.mxu0 %v308
        %v563 = vpop.f32.mrf.mxu0
        %v564 = vadd.f32 %v395, %v563
        %565 = vmatmul.f32.gmra.mxu0 %v310
        %v566 = vpop.f32.mrf.mxu0
        %v567 = vadd.f32 %v395, %v566
        %568 = vmatmul.f32.gmra.mxu0 %v312
        %v569 = vpop.f32.mrf.mxu0
        %v570 = vadd.f32 %v395, %v569
        %571 = vmatmul.f32.gmra.mxu0 %v314
        %v572 = vpop.f32.mrf.mxu0
        %v573 = vadd.f32 %v395, %v572
        %574 = vmatmul.f32.gmra.mxu0 %v316
        %v575 = vpop.f32.mrf.mxu0
        %v576 = vadd.f32 %v395, %v575
        %577 = vmatmul.f32.gmra.mxu0 %v318
        %v578 = vpop.f32.mrf.mxu0
        %v579 = vadd.f32 %v395, %v578
        %580 = vmatmul.f32.gmra.mxu0 %v320
        %v581 = vpop.f32.mrf.mxu0
        %v582 = vadd.f32 %v395, %v581
        %583 = vmatmul.f32.gmra.mxu0 %v322
        %v584 = vpop.f32.mrf.mxu0
        %v585 = vadd.f32 %v395, %v584
        %586 = vmatmul.f32.gmra.mxu0 %v324
        %v587 = vpop.f32.mrf.mxu0
        %v588 = vadd.f32 %v395, %v587
        %589 = vmatmul.f32.gmra.mxu0 %v326
        %v590 = vpop.f32.mrf.mxu0
        %v591 = vadd.f32 %v395, %v590
        %592 = vdwg.mxu0
        %593 = vmatpush.msra.mxu0 %v391
        %594 = vmatpush.msra.mxu0 %v389
        %595 = vmatpush.msra.mxu0 %v387
        %596 = vmatpush.msra.mxu0 %v385
        %597 = vmatpush.msra.mxu0 %v383
        %598 = vmatpush.msra.mxu0 %v381
        %599 = vmatpush.msra.mxu0 %v379
        %600 = vmatpush.msra.mxu0 %v377
        %601 = vmatpush.msra.mxu0 %v375
        %602 = vmatpush.msra.mxu0 %v373
        %603 = vmatpush.msra.mxu0 %v371
        %604 = vmatpush.msra.mxu0 %v369
        %605 = vmatpush.msra.mxu0 %v367
        %606 = vmatpush.msra.mxu0 %v365
        %607 = vmatpush.msra.mxu0 %v363
        %608 = vmatpush.msra.mxu0 %v361
        %609 = vmatmul.f32.gmra.mxu0 %v297
        %v610 = vpop.f32.mrf.mxu0
        %v611 = vadd.f32 %v546, %v610
        %612 = vmatmul.f32.gmra.mxu0 %v299
        %v613 = vpop.f32.mrf.mxu0
        %v614 = vadd.f32 %v549, %v613
        %615 = vmatmul.f32.gmra.mxu0 %v301
        %v616 = vpop.f32.mrf.mxu0
        %v617 = vadd.f32 %v552, %v616
        %618 = vmatmul.f32.gmra.mxu0 %v303
        %v619 = vpop.f32.mrf.mxu0
        %v620 = vadd.f32 %v555, %v619
        %621 = vmatmul.f32.gmra.mxu0 %v305
        %v622 = vpop.f32.mrf.mxu0
        %v623 = vadd.f32 %v558, %v622
        %624 = vmatmul.f32.gmra.mxu0 %v307
        %v625 = vpop.f32.mrf.mxu0
        %v626 = vadd.f32 %v561, %v625
        %627 = vmatmul.f32.gmra.mxu0 %v309
        %v628 = vpop.f32.mrf.mxu0
        %v629 = vadd.f32 %v564, %v628
        %630 = vmatmul.f32.gmra.mxu0 %v311
        %v631 = vpop.f32.mrf.mxu0
        %v632 = vadd.f32 %v567, %v631
        %633 = vmatmul.f32.gmra.mxu0 %v313
        %v634 = vpop.f32.mrf.mxu0
        %v635 = vadd.f32 %v570, %v634
        %636 = vmatmul.f32.gmra.mxu0 %v315
        %v637 = vpop.f32.mrf.mxu0
        %v638 = vadd.f32 %v573, %v637
        %639 = vmatmul.f32.gmra.mxu0 %v317
        %v640 = vpop.f32.mrf.mxu0
        %v641 = vadd.f32 %v576, %v640
        %642 = vmatmul.f32.gmra.mxu0 %v319
        %v643 = vpop.f32.mrf.mxu0
        %v644 = vadd.f32 %v579, %v643
        %645 = vmatmul.f32.gmra.mxu0 %v321
        %v646 = vpop.f32.mrf.mxu0
        %v647 = vadd.f32 %v582, %v646
        %648 = vmatmul.f32.gmra.mxu0 %v323
        %v649 = vpop.f32.mrf.mxu0
        %v650 = vadd.f32 %v585, %v649
        %651 = vmatmul.f32.gmra.mxu0 %v325
        %v652 = vpop.f32.mrf.mxu0
        %v653 = vadd.f32 %v588, %v652
        %654 = vmatmul.f32.gmra.mxu0 %v327
        %v655 = vpop.f32.mrf.mxu0
        %v656 = vadd.f32 %v591, %v655
        %657 = vdwg.mxu0
        %v658 = vmax.f32 %v481, 0.0
        %v659 = vmax.f32 %v611, 0.0
        %v660 = vmax.f32 %v484, 0.0
        %v661 = vmax.f32 %v614, 0.0
        %v662 = vmax.f32 %v487, 0.0
        %v663 = vmax.f32 %v617, 0.0
        %v664 = vmax.f32 %v490, 0.0
        %v665 = vmax.f32 %v620, 0.0
        %v666 = vmax.f32 %v493, 0.0
        %v667 = vmax.f32 %v623, 0.0
        %v668 = vmax.f32 %v496, 0.0
        %v669 = vmax.f32 %v626, 0.0
        %v670 = vmax.f32 %v499, 0.0
        %v671 = vmax.f32 %v629, 0.0
        %v672 = vmax.f32 %v502, 0.0
        %v673 = vmax.f32 %v632, 0.0
        %v674 = vmax.f32 %v505, 0.0
        %v675 = vmax.f32 %v635, 0.0
        %v676 = vmax.f32 %v508, 0.0
        %v677 = vmax.f32 %v638, 0.0
        %v678 = vmax.f32 %v511, 0.0
        %v679 = vmax.f32 %v641, 0.0
        %v680 = vmax.f32 %v514, 0.0
        %v681 = vmax.f32 %v644, 0.0
        %v682 = vmax.f32 %v517, 0.0
        %v683 = vmax.f32 %v647, 0.0
        %v684 = vmax.f32 %v520, 0.0
        %v685 = vmax.f32 %v650, 0.0
        %v686 = vmax.f32 %v523, 0.0
        %v687 = vmax.f32 %v653, 0.0
        %v688 = vmax.f32 %v526, 0.0
        %v689 = vmax.f32 %v656, 0.0
        %v690 = vld [vmem:[#allocation8] sm:$0xff]
        %v691 = vld [vmem:[#allocation8 + $0x8] sm:$0xff]
        %v692 = vld [vmem:[#allocation8 + $0x10] sm:$0xff]
        %v693 = vld [vmem:[#allocation8 + $0x18] sm:$0xff]
        %v694 = vld [vmem:[#allocation8 + $0x20] sm:$0xff]
        %v695 = vld [vmem:[#allocation8 + $0x28] sm:$0xff]
        %v696 = vld [vmem:[#allocation8 + $0x30] sm:$0xff]
        %v697 = vld [vmem:[#allocation8 + $0x38] sm:$0xff]
        %v698 = vld [vmem:[#allocation8 + $0x40] sm:$0xff]
        %v699 = vld [vmem:[#allocation8 + $0x48] sm:$0xff]
        %v700 = vld [vmem:[#allocation8 + $0x50] sm:$0xff]
        %v701 = vld [vmem:[#allocation8 + $0x58] sm:$0xff]
        %v702 = vld [vmem:[#allocation8 + $0x60] sm:$0xff]
        %v703 = vld [vmem:[#allocation8 + $0x68] sm:$0xff]
        %v704 = vld [vmem:[#allocation8 + $0x70] sm:$0xff]
        %v705 = vld [vmem:[#allocation8 + $0x78] sm:$0xff]
        %v706 = vld [vmem:[#allocation8 + $0x80] sm:$0xff]
        %v707 = vld [vmem:[#allocation8 + $0x88] sm:$0xff]
        %v708 = vld [vmem:[#allocation8 + $0x90] sm:$0xff]
        %v709 = vld [vmem:[#allocation8 + $0x98] sm:$0xff]
        %v710 = vld [vmem:[#allocation8 + $0xa0] sm:$0xff]
        %v711 = vld [vmem:[#allocation8 + $0xa8] sm:$0xff]
        %v712 = vld [vmem:[#allocation8 + $0xb0] sm:$0xff]
        %v713 = vld [vmem:[#allocation8 + $0xb8] sm:$0xff]
        %v714 = vld [vmem:[#allocation8 + $0xc0] sm:$0xff]
        %v715 = vld [vmem:[#allocation8 + $0xc8] sm:$0xff]
        %v716 = vld [vmem:[#allocation8 + $0xd0] sm:$0xff]
        %v717 = vld [vmem:[#allocation8 + $0xd8] sm:$0xff]
        %v718 = vld [vmem:[#allocation8 + $0xe0] sm:$0xff]
        %v719 = vld [vmem:[#allocation8 + $0xe8] sm:$0xff]
        %v720 = vld [vmem:[#allocation8 + $0xf0] sm:$0xff]
        %v721 = vld [vmem:[#allocation8 + $0xf8] sm:$0xff]
        %v722 = vld [vmem:[%s4] sm:$0x1]
        %v724 = vperm.slane %v722, 0
        %726 = vmatpush.msra.mxu0 %v705
        %727 = vmatpush.msra.mxu0 %v704
        %728 = vmatpush.msra.mxu0 %v703
        %729 = vmatpush.msra.mxu0 %v702
        %730 = vmatpush.msra.mxu0 %v701
        %731 = vmatpush.msra.mxu0 %v700
        %732 = vmatpush.msra.mxu0 %v699
        %733 = vmatpush.msra.mxu0 %v698
        %734 = vmatpush.msra.mxu0 %v697
        %735 = vmatpush.msra.mxu0 %v696
        %736 = vmatpush.msra.mxu0 %v695
        %737 = vmatpush.msra.mxu0 %v694
        %738 = vmatpush.msra.mxu0 %v693
        %739 = vmatpush.msra.mxu0 %v692
        %740 = vmatpush.msra.mxu0 %v691
        %741 = vmatpush.msra.mxu0 %v690
        %742 = vmatmul.f32.gmra.mxu0 %v658
        %v743 = vpop.f32.mrf.mxu0
        %v744 = vadd.f32 %v724, %v743
        %745 = vmatmul.f32.gmra.mxu0 %v660
        %v746 = vpop.f32.mrf.mxu0
        %v747 = vadd.f32 %v724, %v746
        %748 = vmatmul.f32.gmra.mxu0 %v662
        %v749 = vpop.f32.mrf.mxu0
        %v750 = vadd.f32 %v724, %v749
        %751 = vmatmul.f32.gmra.mxu0 %v664
        %v752 = vpop.f32.mrf.mxu0
        %v753 = vadd.f32 %v724, %v752
        %754 = vmatmul.f32.gmra.mxu0 %v666
        %v755 = vpop.f32.mrf.mxu0
        %v756 = vadd.f32 %v724, %v755
        %757 = vmatmul.f32.gmra.mxu0 %v668
        %v758 = vpop.f32.mrf.mxu0
        %v759 = vadd.f32 %v724, %v758
        %760 = vmatmul.f32.gmra.mxu0 %v670
        %v761 = vpop.f32.mrf.mxu0
        %v762 = vadd.f32 %v724, %v761
        %763 = vmatmul.f32.gmra.mxu0 %v672
        %v764 = vpop.f32.mrf.mxu0
        %v765 = vadd.f32 %v724, %v764
        %766 = vmatmul.f32.gmra.mxu0 %v674
        %v767 = vpop.f32.mrf.mxu0
        %v768 = vadd.f32 %v724, %v767
        %769 = vmatmul.f32.gmra.mxu0 %v676
        %v770 = vpop.f32.mrf.mxu0
        %v771 = vadd.f32 %v724, %v770
        %772 = vmatmul.f32.gmra.mxu0 %v678
        %v773 = vpop.f32.mrf.mxu0
        %v774 = vadd.f32 %v724, %v773
        %775 = vmatmul.f32.gmra.mxu0 %v680
        %v776 = vpop.f32.mrf.mxu0
        %v777 = vadd.f32 %v724, %v776
        %778 = vmatmul.f32.gmra.mxu0 %v682
        %v779 = vpop.f32.mrf.mxu0
        %v780 = vadd.f32 %v724, %v779
        %781 = vmatmul.f32.gmra.mxu0 %v684
        %v782 = vpop.f32.mrf.mxu0
        %v783 = vadd.f32 %v724, %v782
        %784 = vmatmul.f32.gmra.mxu0 %v686
        %v785 = vpop.f32.mrf.mxu0
        %v786 = vadd.f32 %v724, %v785
        %787 = vmatmul.f32.gmra.mxu0 %v688
        %v788 = vpop.f32.mrf.mxu0
        %v789 = vadd.f32 %v724, %v788
        %790 = vdwg.mxu0
        %791 = vmatpush.msra.mxu0 %v721
        %792 = vmatpush.msra.mxu0 %v720
        %793 = vmatpush.msra.mxu0 %v719
        %794 = vmatpush.msra.mxu0 %v718
        %795 = vmatpush.msra.mxu0 %v717
        %796 = vmatpush.msra.mxu0 %v716
        %797 = vmatpush.msra.mxu0 %v715
        %798 = vmatpush.msra.mxu0 %v714
        %799 = vmatpush.msra.mxu0 %v713
        %800 = vmatpush.msra.mxu0 %v712
        %801 = vmatpush.msra.mxu0 %v711
        %802 = vmatpush.msra.mxu0 %v710
        %803 = vmatpush.msra.mxu0 %v709
        %804 = vmatpush.msra.mxu0 %v708
        %805 = vmatpush.msra.mxu0 %v707
        %806 = vmatpush.msra.mxu0 %v706
        %807 = vmatmul.f32.gmra.mxu0 %v659
        %v808 = vpop.f32.mrf.mxu0
        %v809 = vadd.f32 %v744, %v808
        %810 = vmatmul.f32.gmra.mxu0 %v661
        %v811 = vpop.f32.mrf.mxu0
        %v812 = vadd.f32 %v747, %v811
        %813 = vmatmul.f32.gmra.mxu0 %v663
        %v814 = vpop.f32.mrf.mxu0
        %v815 = vadd.f32 %v750, %v814
        %816 = vmatmul.f32.gmra.mxu0 %v665
        %v817 = vpop.f32.mrf.mxu0
        %v818 = vadd.f32 %v753, %v817
        %819 = vmatmul.f32.gmra.mxu0 %v667
        %v820 = vpop.f32.mrf.mxu0
        %v821 = vadd.f32 %v756, %v820
        %822 = vmatmul.f32.gmra.mxu0 %v669
        %v823 = vpop.f32.mrf.mxu0
        %v824 = vadd.f32 %v759, %v823
        %825 = vmatmul.f32.gmra.mxu0 %v671
        %v826 = vpop.f32.mrf.mxu0
        %v827 = vadd.f32 %v762, %v826
        %828 = vmatmul.f32.gmra.mxu0 %v673
        %v829 = vpop.f32.mrf.mxu0
        %v830 = vadd.f32 %v765, %v829
        %831 = vmatmul.f32.gmra.mxu0 %v675
        %v832 = vpop.f32.mrf.mxu0
        %v833 = vadd.f32 %v768, %v832
        %834 = vmatmul.f32.gmra.mxu0 %v677
        %v835 = vpop.f32.mrf.mxu0
        %v836 = vadd.f32 %v771, %v835
        %837 = vmatmul.f32.gmra.mxu0 %v679
        %v838 = vpop.f32.mrf.mxu0
        %v839 = vadd.f32 %v774, %v838
        %840 = vmatmul.f32.gmra.mxu0 %v681
        %v841 = vpop.f32.mrf.mxu0
        %v842 = vadd.f32 %v777, %v841
        %843 = vmatmul.f32.gmra.mxu0 %v683
        %v844 = vpop.f32.mrf.mxu0
        %v845 = vadd.f32 %v780, %v844
        %846 = vmatmul.f32.gmra.mxu0 %v685
        %v847 = vpop.f32.mrf.mxu0
        %v848 = vadd.f32 %v783, %v847
        %849 = vmatmul.f32.gmra.mxu0 %v687
        %v850 = vpop.f32.mrf.mxu0
        %v851 = vadd.f32 %v786, %v850
        %852 = vmatmul.f32.gmra.mxu0 %v689
        %v853 = vpop.f32.mrf.mxu0
        %v854 = vadd.f32 %v789, %v853
        %855 = vdwg.mxu0
        %856 = vst [vmem:[%s293] sm:$0xff] %v809
        %857 = vst [vmem:[%s293 + $0x8] sm:$0xff] %v812
        %858 = vst [vmem:[%s293 + $0x10] sm:$0xff] %v815
        %859 = vst [vmem:[%s293 + $0x18] sm:$0xff] %v818
        %860 = vst [vmem:[%s293 + $0x20] sm:$0xff] %v821
        %861 = vst [vmem:[%s293 + $0x28] sm:$0xff] %v824
        %862 = vst [vmem:[%s293 + $0x30] sm:$0xff] %v827
        %863 = vst [vmem:[%s293 + $0x38] sm:$0xff] %v830
        %864 = vst [vmem:[%s293 + $0x40] sm:$0xff] %v833
        %865 = vst [vmem:[%s293 + $0x48] sm:$0xff] %v836
        %866 = vst [vmem:[%s293 + $0x50] sm:$0xff] %v839
        %867 = vst [vmem:[%s293 + $0x58] sm:$0xff] %v842
        %868 = vst [vmem:[%s293 + $0x60] sm:$0xff] %v845
        %869 = vst [vmem:[%s293 + $0x68] sm:$0xff] %v848
        %870 = vst [vmem:[%s293 + $0x70] sm:$0xff] %v851
        %871 = vst [vmem:[%s293 + $0x78] sm:$0xff] %v854
        %s872 = sand.u32 %s142, 1
        %s873 = scalar_lea.sflag [#allocation4], %s872
        %s874 = sand.u32 %s142, 1
        %s875 = smul.addr %s874, 128
        %s876 = scalar_lea.vmem [#allocation10], %s875
        // Predicated region
        $region57: #{tpu_custom_call.1} parent=39 // pred_check
          %p877 = pneg %p152
        $region58: #{tpu_custom_call.1} parent=39 // pred_check_branch
          %879 = sbr.rel (%p877) target = $region60
        $region59: #{tpu_custom_call.1} parent=39 // pred_region
          %s880 = smul.u32 16, %s24
          %882 = vsyncadd %s873, 0
          %s883 = smul.addr %s880, 8
          %s884 = scalar_lea.hbm %s5, %s883
          %s885 = sshll.u32 %s876, 4
          %s886 = int_to_ptr.vmem [resolvable:$true] %s885
          %s887 = sshll.u32 %s884, 4
          %s888 = int_to_ptr.hbm [resolvable:$true] %s887
          %893 = dma.vmem_to_hbm [thread:$0]  %s886, 2048, %s888, %s873, 128, 128, 8
        $region60: #{tpu_custom_call.1} parent=39 // pred_fallthru
          _
      $region40: #{tpu_custom_call.1} parent=5 // pred_fallthru
        _
      %p894 = scmp.le.s32.totalorder 2, %s19
      // Predicated region
      $region61: #{tpu_custom_call.1} parent=5 // pred_check
        %p895 = pneg %p894
      $region62: #{tpu_custom_call.1} parent=5 // pred_check_branch
        %897 = sbr.rel (%p895) target = $region64
      $region63: #{tpu_custom_call.1} parent=5 // pred_region
        %s898 = ssub.s32 %s19, 2
        // Predicated region
        $region65: #{tpu_custom_call.1} parent=63 // pred_check
          %p899 = pneg %p158
        $region66: #{tpu_custom_call.1} parent=63 // pred_check_branch
          %901 = sbr.rel (%p899) target = $region68
        $region67: #{tpu_custom_call.1} parent=63 // pred_region
          %s902 = sand.u32 %s143, 1
          %s903 = scalar_lea.sflag [#allocation4], %s902
          %s904 = sand.u32 %s143, 1
          %s905 = smul.addr %s904, 128
          %s906 = scalar_lea.vmem [#allocation10], %s905
          %908 = dma.done %s903, 2048
        $region68: #{tpu_custom_call.1} parent=63 // pred_fallthru
          _
      $region64: #{tpu_custom_call.1} parent=5 // pred_fallthru
        _
    $region6: #{tpu_custom_call.1} parent=1 // loop_footer
      %s23 = sadd.s32 1, %s19
    $region7: #{tpu_custom_call.1} parent=1 // loop_footer_branch
      %18 = sbr.rel target = $region3
    $region8: #{tpu_custom_call.1} parent=1 // loop_exit
      _
    %909 = vsyncpa [#allocation3], 1
    %s910 = scalar_lea.sflag [#allocation3], 1
    %911 = vsyncpa %s910, 1
    %912 = vsyncpa [#allocation6], 1
    %913 = vsyncpa [#allocation9], 1
    %914 = vsyncpa [#allocation4], 1
    %s915 = scalar_lea.sflag [#allocation4], 1
    %916 = vsyncpa %s915, 1

</llo_original>
